<compile_context>
chip_gen: v6e
topology: v6e:2x2x1
jax: 0.10.0
libtpu: 0.0.40
codegen_flags: <defaults>
</compile_context>

<pallas_src>
import jax
import jax.numpy as jnp
from jax.experimental import pallas as pl
from jax.experimental.pallas import tpu as pltpu  # noqa: F401  (TPU backend)

# ---- synthetic BERT config (small) ------------------------------------------
VOCAB = 100
HIDDEN = 32
NUM_LAYERS = 2
NUM_HEADS = 2
HEAD_DIM = HIDDEN // NUM_HEADS
INTERMEDIATE = 64
MAX_POS = 64
TYPE_VOCAB = 2
LN_EPS = 1e-12
ATTN_SCALE = 1.0 / (HEAD_DIM ** 0.5)


# ---- in-kernel helpers (pure value math, elementwise in f32) -----------------
def _layernorm(x, gamma, beta):
    mu = jnp.mean(x, axis=-1, keepdims=True)
    var = jnp.mean(jnp.square(x - mu), axis=-1, keepdims=True)
    return (x - mu) * jax.lax.rsqrt(var + LN_EPS) * gamma + beta


def _erf(x):
    # Abramowitz & Stegun 7.1.26 (max abs err ~1.5e-7, i.e. f32-exact) so the
    # exact-GELU form matches HF BERT without needing a lax.erf lowering rule.
    p = 0.3275911
    a1, a2, a3, a4, a5 = 0.254829592, -0.284496736, 1.421413741, -1.453152027, 1.061405429
    ax = jnp.abs(x)
    t = 1.0 / (1.0 + p * ax)
    poly = ((((a5 * t + a4) * t + a3) * t + a2) * t + a1) * t
    y = 1.0 - poly * jnp.exp(-ax * ax)
    return jnp.where(x >= 0.0, y, -y)


def _gelu_exact(x):
    # HuggingFace BertModel default hidden_act = exact (erf) GELU.
    return 0.5 * x * (1.0 + _erf(x * 0.7071067811865476))


# ---- fused whole-model kernel ------------------------------------------------
def _bert_encoder_kernel(
    x_ref, mask_ref,
    emb_ln_g_ref, emb_ln_b_ref,
    qkv_w_ref, qkv_b_ref, o_w_ref, o_b_ref,
    ln1_g_ref, ln1_b_ref,
    ff1_w_ref, ff1_b_ref, ff2_w_ref, ff2_b_ref,
    ln2_g_ref, ln2_b_ref,
    out_ref,
):
    # x_ref:    (B*S, H)    f32 summed embeddings.
    # mask_ref: (B*S, B*S)  f32 additive mask, precomputed in the wrapper:
    #           0 for same-batch valid keys, -10000 for same-batch padded keys
    #           (HF legacy convention), -1e9 for cross-batch pairs (structural
    #           block-diagonal; exp underflows to exactly 0, so the flattened
    #           softmax is identical to per-sequence softmax).
    mask = mask_ref[...]
    h = _layernorm(x_ref[...], emb_ln_g_ref[...], emb_ln_b_ref[...])

    # TODO(synk): at L >= ~12 switch this static unroll to lax.fori_loop over the
    # stacked (L, ...) weight refs to keep vreg live ranges flat.
    for l in range(NUM_LAYERS):
        # --- fused QKV projection: bf16 operands on the MXU, f32 accumulation --
        h16 = h.astype(jnp.bfloat16)
        qkv = jnp.dot(h16, qkv_w_ref[l],
                      preferred_element_type=jnp.float32) + qkv_b_ref[l]   # (B*S, 3H) f32
        qkv16 = qkv.astype(jnp.bfloat16)

        # --- flattened-token attention (no per-batch loop) ---------------------
        # Per head: one (B*S, Dh) x (B*S, Dh)^T score matmul over ALL tokens of
        # ALL batches, masked block-diagonal, then one (B*S, B*S) x (B*S, Dh)
        # PV matmul.  Only static lane slices of the fused qkv tile are needed.
        head_ctx = []
        for hd in range(NUM_HEADS):
            q_lo = 0 * HIDDEN + hd * HEAD_DIM
            k_lo = 1 * HIDDEN + hd * HEAD_DIM
            v_lo = 2 * HIDDEN + hd * HEAD_DIM
            qh = qkv16[:, q_lo:q_lo + HEAD_DIM]
            kh = qkv16[:, k_lo:k_lo + HEAD_DIM]
            vh = qkv16[:, v_lo:v_lo + HEAD_DIM]

            # s = qh @ kh.T  (NT dot_general: no materialized transpose)
            s = jax.lax.dot_general(
                qh, kh, (((1,), (1,)), ((), ())),
                preferred_element_type=jnp.float32) * ATTN_SCALE
            s = s + mask                                   # single resident-tile add
            s = s - jnp.max(s, axis=-1, keepdims=True)
            p = jnp.exp(s)
            # EUP reciprocal instead of a VALU divide.
            p = p * pl.reciprocal(jnp.sum(p, axis=-1, keepdims=True), approx=True)
            head_ctx.append(jnp.dot(p.astype(jnp.bfloat16), vh,
                                    preferred_element_type=jnp.float32))
        ctx = jnp.concatenate(head_ctx, axis=-1)           # (B*S, H) f32

        # --- output projection + residual + LayerNorm --------------------------
        attn_out = jnp.dot(ctx.astype(jnp.bfloat16), o_w_ref[l],
                           preferred_element_type=jnp.float32) + o_b_ref[l]
        h = _layernorm(attn_out + h, ln1_g_ref[l], ln1_b_ref[l])

        # --- fused FFN: FF1 + exact GELU + FF2 + residual + LayerNorm ----------
        ff = jnp.dot(h.astype(jnp.bfloat16), ff1_w_ref[l],
                     preferred_element_type=jnp.float32) + ff1_b_ref[l]
        ff = _gelu_exact(ff)
        ff = jnp.dot(ff.astype(jnp.bfloat16), ff2_w_ref[l],
                     preferred_element_type=jnp.float32) + ff2_b_ref[l]
        h = _layernorm(ff + h, ln2_g_ref[l], ln2_b_ref[l])

    # TODO(synk): output last-dim is 32 (<128 lanes) -> masked vst; trivial at
    # this size, repack to a lane-dense slab only if hidden stays <128 at scale.
    out_ref[...] = h.astype(out_ref.dtype)


def bert_encoder(x, attn_mask, params):
    BS, H = x.shape
    # Single gridless invocation: every operand is a whole-array VMEM block.
    # Total VMEM footprint is well under 1 MiB, so no tiling is needed here.
    # (If scaled to real BERT sizes: add a grid with an 'arbitrary' layer axis
    #  streaming per-layer weights and a 'parallel' token-block axis -- mandatory
    #  on v7x with 64 MiB VMEM / 2 TensorCores.)
    return pl.pallas_call(
        _bert_encoder_kernel,
        out_shape=jax.ShapeDtypeStruct((BS, H), jnp.float32),
    )(
        x, attn_mask,
        params["emb_ln_g"], params["emb_ln_b"],
        params["qkv_w"], params["qkv_b"], params["o_w"], params["o_b"],
        params["ln1_g"], params["ln1_b"],
        params["ff1_w"], params["ff1_b"], params["ff2_w"], params["ff2_b"],
        params["ln2_g"], params["ln2_b"],
    )


# ---- deterministic parameter init (pre-stacked / pre-fused layouts) ----------
def init_params(key):
    keys = jax.random.split(key, 3 + NUM_LAYERS)

    def norm(k, shape):
        return 0.02 * jax.random.normal(k, shape, jnp.float32)

    qkv_w, o_w, ff1_w, ff2_w = [], [], [], []
    for li in range(NUM_LAYERS):
        lk = jax.random.split(keys[3 + li], 6)
        qkv_w.append(jnp.concatenate(
            [norm(lk[0], (HIDDEN, HIDDEN)),
             norm(lk[1], (HIDDEN, HIDDEN)),
             norm(lk[2], (HIDDEN, HIDDEN))], axis=1))            # (H, 3H)
        o_w.append(norm(lk[3], (HIDDEN, HIDDEN)))
        ff1_w.append(norm(lk[4], (HIDDEN, INTERMEDIATE)))
        ff2_w.append(norm(lk[5], (INTERMEDIATE, HIDDEN)))

    L = NUM_LAYERS
    bf16 = jnp.bfloat16
    return {
        "word_emb": norm(keys[0], (VOCAB, HIDDEN)),
        "pos_emb": norm(keys[1], (MAX_POS, HIDDEN)),
        "type_emb": norm(keys[2], (TYPE_VOCAB, HIDDEN)),
        "emb_ln_g": jnp.ones((1, HIDDEN), jnp.float32),
        "emb_ln_b": jnp.zeros((1, HIDDEN), jnp.float32),
        # Matmul weights stored as bf16 (native MXU dtype); biases/LN stay f32.
        "qkv_w": jnp.stack(qkv_w).astype(bf16),                  # (L, H, 3H)
        "qkv_b": jnp.zeros((L, 1, 3 * HIDDEN), jnp.float32),
        "o_w": jnp.stack(o_w).astype(bf16),                      # (L, H, H)
        "o_b": jnp.zeros((L, 1, HIDDEN), jnp.float32),
        "ln1_g": jnp.ones((L, 1, HIDDEN), jnp.float32),
        "ln1_b": jnp.zeros((L, 1, HIDDEN), jnp.float32),
        "ff1_w": jnp.stack(ff1_w).astype(bf16),                  # (L, H, I)
        "ff1_b": jnp.zeros((L, 1, INTERMEDIATE), jnp.float32),
        "ff2_w": jnp.stack(ff2_w).astype(bf16),                  # (L, I, H)
        "ff2_b": jnp.zeros((L, 1, HIDDEN), jnp.float32),
        "ln2_g": jnp.ones((L, 1, HIDDEN), jnp.float32),
        "ln2_b": jnp.zeros((L, 1, HIDDEN), jnp.float32),
    }


# ---- forward pass: returns last_hidden_state ---------------------------------
@jax.jit
def bert_forward(params, sentence_tokens, sentence_masks):
    B, S = sentence_tokens.shape

    # Embeddings (gather = glue in plain JAX); token_type_ids assumed all zero.
    # TODO(synk): reference always uses all-zero segment ids here.
    word = params["word_emb"][sentence_tokens]                   # (B, S, H)
    pos = params["pos_emb"][jnp.arange(S)][None, :, :]           # (1, S, H)
    typ = params["type_emb"][0][None, None, :]                   # (1, 1, H)
    x = (word + pos + typ).reshape(B * S, HIDDEN)

    # Lane-dense (B*S, B*S) additive attention mask, precomputed once:
    #   - HF-style key-padding: -10000 for masked keys (legacy HF convention),
    #   - block-diagonal structure: -1e9 across batches (exp underflows to 0),
    # so the kernel adds one resident tile per head instead of broadcasting a
    # (1, S) row mask B*NH times per layer.
    batch_id = jnp.repeat(jnp.arange(B), S)                      # (B*S,)
    same_batch = batch_id[:, None] == batch_id[None, :]          # (B*S, B*S)
    pad_add = (1.0 - sentence_masks.astype(jnp.float32).reshape(B * S))[None, :] * -10000.0
    pad_add = jnp.broadcast_to(pad_add, (B * S, B * S))
    attn_mask = jnp.where(same_batch, pad_add, -1e9).astype(jnp.float32)

    h = bert_encoder(x, attn_mask, params)
    return h.reshape(B, S, HIDDEN)   # last_hidden_state


if __name__ == "__main__":
    key = jax.random.PRNGKey(0)
    pkey, tkey = jax.random.split(key)
    params = init_params(pkey)

    B, S = 2, 8
    sentence_tokens = jax.random.randint(tkey, (B, S), 0, VOCAB, dtype=jnp.int32)
    sentence_masks = jnp.array(
        [[1, 1, 1, 1, 1, 1, 1, 1],
         [1, 1, 1, 1, 1, 1, 0, 0]], dtype=jnp.int32)

    out = bert_forward(params, sentence_tokens, sentence_masks)
    out = jax.block_until_ready(out)
    assert out.shape == (B, S, HIDDEN) and out.dtype == jnp.float32
    assert bool(jnp.all(jnp.isfinite(out)))
    print("KERNEL_OK")
</pallas_src>

<mosaic_0001>
module attributes {stable_mosaic.version = 11 : i64} {
  func.func @_bert_encoder_kernel(%arg0: memref<16x32xf32, #tpu.memory_space<vmem>>, %arg1: memref<16x16xf32, #tpu.memory_space<vmem>>, %arg2: memref<1x32xf32, #tpu.memory_space<vmem>>, %arg3: memref<1x32xf32, #tpu.memory_space<vmem>>, %arg4: memref<2x32x96xbf16, #tpu.memory_space<vmem>>, %arg5: memref<2x1x96xf32, #tpu.memory_space<vmem>>, %arg6: memref<2x32x32xbf16, #tpu.memory_space<vmem>>, %arg7: memref<2x1x32xf32, #tpu.memory_space<vmem>>, %arg8: memref<2x1x32xf32, #tpu.memory_space<vmem>>, %arg9: memref<2x1x32xf32, #tpu.memory_space<vmem>>, %arg10: memref<2x32x64xbf16, #tpu.memory_space<vmem>>, %arg11: memref<2x1x64xf32, #tpu.memory_space<vmem>>, %arg12: memref<2x64x32xbf16, #tpu.memory_space<vmem>>, %arg13: memref<2x1x32xf32, #tpu.memory_space<vmem>>, %arg14: memref<2x1x32xf32, #tpu.memory_space<vmem>>, %arg15: memref<2x1x32xf32, #tpu.memory_space<vmem>>, %arg16: memref<16x32xf32, #tpu.memory_space<vmem>>) attributes {dimension_semantics = [], scalar_prefetch = 0 : i64, scratch_operands = 0 : i64, tpu.core_type = #tpu.core_type<tc>} {
    %c0 = arith.constant 0 : index
    %c0_0 = arith.constant 0 : index
    %0 = vector.load %arg1[%c0, %c0_0] : memref<16x16xf32, #tpu.memory_space<vmem>>, vector<16x16xf32>
    %c0_1 = arith.constant 0 : index
    %c0_2 = arith.constant 0 : index
    %1 = vector.load %arg0[%c0_1, %c0_2] : memref<16x32xf32, #tpu.memory_space<vmem>>, vector<16x32xf32>
    %c0_3 = arith.constant 0 : index
    %c0_4 = arith.constant 0 : index
    %2 = vector.load %arg2[%c0_3, %c0_4] : memref<1x32xf32, #tpu.memory_space<vmem>>, vector<1x32xf32>
    %c0_5 = arith.constant 0 : index
    %c0_6 = arith.constant 0 : index
    %3 = vector.load %arg3[%c0_5, %c0_6] : memref<1x32xf32, #tpu.memory_space<vmem>>, vector<1x32xf32>
    %cst = arith.constant dense<0.000000e+00> : vector<16xf32>
    %4 = vector.multi_reduction <add>, %1, %cst [1] : vector<16x32xf32> to vector<16xf32>
    %5 = vector.shape_cast %4 : vector<16xf32> to vector<16x1xf32>
    %cst_7 = arith.constant 3.200000e+01 : f32
    %6 = vector.broadcast %cst_7 : f32 to vector<16x1xf32>
    %7 = arith.divf %5, %6 : vector<16x1xf32>
    %8 = vector.broadcast %7 : vector<16x1xf32> to vector<16x32xf32>
    %9 = arith.subf %1, %8 : vector<16x32xf32>
    %10 = arith.mulf %9, %9 : vector<16x32xf32>
    %cst_8 = arith.constant dense<0.000000e+00> : vector<16xf32>
    %11 = vector.multi_reduction <add>, %10, %cst_8 [1] : vector<16x32xf32> to vector<16xf32>
    %12 = vector.shape_cast %11 : vector<16xf32> to vector<16x1xf32>
    %cst_9 = arith.constant 3.200000e+01 : f32
    %13 = vector.broadcast %cst_9 : f32 to vector<16x1xf32>
    %14 = arith.divf %12, %13 : vector<16x1xf32>
    %15 = vector.broadcast %7 : vector<16x1xf32> to vector<16x32xf32>
    %16 = arith.subf %1, %15 : vector<16x32xf32>
    %cst_10 = arith.constant 9.99999996E-13 : f32
    %17 = vector.broadcast %cst_10 : f32 to vector<16x1xf32>
    %18 = arith.addf %14, %17 : vector<16x1xf32>
    %19 = math.rsqrt %18 : vector<16x1xf32>
    %20 = vector.broadcast %19 : vector<16x1xf32> to vector<16x32xf32>
    %21 = arith.mulf %16, %20 : vector<16x32xf32>
    %22 = vector.broadcast %2 : vector<1x32xf32> to vector<16x32xf32>
    %23 = arith.mulf %21, %22 : vector<16x32xf32>
    %24 = vector.broadcast %3 : vector<1x32xf32> to vector<16x32xf32>
    %25 = arith.addf %23, %24 : vector<16x32xf32>
    %26 = arith.truncf %25 : vector<16x32xf32> to vector<16x32xbf16>
    %c0_11 = arith.constant 0 : index
    %c0_12 = arith.constant 0 : index
    %c0_13 = arith.constant 0 : index
    %27 = vector.load %arg4[%c0_11, %c0_12, %c0_13] : memref<2x32x96xbf16, #tpu.memory_space<vmem>>, vector<1x32x96xbf16>
    %28 = vector.shape_cast %27 : vector<1x32x96xbf16> to vector<32x96xbf16>
    %cst_14 = arith.constant dense<0.000000e+00> : vector<16x96xf32>
    %29 = tpu.matmul %26, %28, %cst_14 {dimension_numbers = #tpu.dot_dimension_numbers<[1], [0], [0], [1], [0, 0, 1, 1], [], []>} : vector<16x32xbf16>, vector<32x96xbf16>, vector<16x96xf32> -> vector<16x96xf32>
    %c0_15 = arith.constant 0 : index
    %c0_16 = arith.constant 0 : index
    %c0_17 = arith.constant 0 : index
    %30 = vector.load %arg5[%c0_15, %c0_16, %c0_17] : memref<2x1x96xf32, #tpu.memory_space<vmem>>, vector<1x1x96xf32>
    %31 = vector.shape_cast %30 : vector<1x1x96xf32> to vector<1x96xf32>
    %32 = vector.broadcast %31 : vector<1x96xf32> to vector<16x96xf32>
    %33 = arith.addf %29, %32 : vector<16x96xf32>
    %34 = arith.truncf %33 : vector<16x96xf32> to vector<16x96xbf16>
    %35 = vector.extract_strided_slice %34 {offsets = [0, 0], sizes = [16, 16], strides = [1, 1]} : vector<16x96xbf16> to vector<16x16xbf16>
    %36 = vector.extract_strided_slice %34 {offsets = [0, 32], sizes = [16, 16], strides = [1, 1]} : vector<16x96xbf16> to vector<16x16xbf16>
    %37 = vector.extract_strided_slice %34 {offsets = [0, 64], sizes = [16, 16], strides = [1, 1]} : vector<16x96xbf16> to vector<16x16xbf16>
    %cst_18 = arith.constant dense<0.000000e+00> : vector<16x16xf32>
    %38 = tpu.matmul %35, %36, %cst_18 {dimension_numbers = #tpu.dot_dimension_numbers<[1], [1], [0], [0], [0, 0, 1, 0], [], []>} : vector<16x16xbf16>, vector<16x16xbf16>, vector<16x16xf32> -> vector<16x16xf32>
    %cst_19 = arith.constant 2.500000e-01 : f32
    %39 = vector.broadcast %cst_19 : f32 to vector<16x16xf32>
    %40 = arith.mulf %38, %39 : vector<16x16xf32>
    %41 = arith.addf %40, %0 : vector<16x16xf32>
    %cst_20 = arith.constant dense<0xFF800000> : vector<16xf32>
    %42 = vector.multi_reduction <maximumf>, %41, %cst_20 [1] : vector<16x16xf32> to vector<16xf32>
    %43 = vector.shape_cast %42 : vector<16xf32> to vector<16x1xf32>
    %44 = vector.broadcast %43 : vector<16x1xf32> to vector<16x16xf32>
    %45 = arith.subf %41, %44 : vector<16x16xf32>
    %46 = math.exp %45 : vector<16x16xf32>
    %cst_21 = arith.constant dense<0.000000e+00> : vector<16xf32>
    %47 = vector.multi_reduction <add>, %46, %cst_21 [1] : vector<16x16xf32> to vector<16xf32>
    %48 = vector.shape_cast %47 : vector<16xf32> to vector<16x1xf32>
    %49 = tpu.reciprocal %48 {approx = true} : vector<16x1xf32> -> vector<16x1xf32>
    %50 = vector.broadcast %49 : vector<16x1xf32> to vector<16x16xf32>
    %51 = arith.mulf %46, %50 : vector<16x16xf32>
    %52 = arith.truncf %51 : vector<16x16xf32> to vector<16x16xbf16>
    %cst_22 = arith.constant dense<0.000000e+00> : vector<16x16xf32>
    %53 = tpu.matmul %52, %37, %cst_22 {dimension_numbers = #tpu.dot_dimension_numbers<[1], [0], [0], [1], [0, 0, 1, 1], [], []>} : vector<16x16xbf16>, vector<16x16xbf16>, vector<16x16xf32> -> vector<16x16xf32>
    %54 = vector.extract_strided_slice %34 {offsets = [0, 16], sizes = [16, 16], strides = [1, 1]} : vector<16x96xbf16> to vector<16x16xbf16>
    %55 = vector.extract_strided_slice %34 {offsets = [0, 48], sizes = [16, 16], strides = [1, 1]} : vector<16x96xbf16> to vector<16x16xbf16>
    %56 = vector.extract_strided_slice %34 {offsets = [0, 80], sizes = [16, 16], strides = [1, 1]} : vector<16x96xbf16> to vector<16x16xbf16>
    %cst_23 = arith.constant dense<0.000000e+00> : vector<16x16xf32>
    %57 = tpu.matmul %54, %55, %cst_23 {dimension_numbers = #tpu.dot_dimension_numbers<[1], [1], [0], [0], [0, 0, 1, 0], [], []>} : vector<16x16xbf16>, vector<16x16xbf16>, vector<16x16xf32> -> vector<16x16xf32>
    %cst_24 = arith.constant 2.500000e-01 : f32
    %58 = vector.broadcast %cst_24 : f32 to vector<16x16xf32>
    %59 = arith.mulf %57, %58 : vector<16x16xf32>
    %60 = arith.addf %59, %0 : vector<16x16xf32>
    %cst_25 = arith.constant dense<0xFF800000> : vector<16xf32>
    %61 = vector.multi_reduction <maximumf>, %60, %cst_25 [1] : vector<16x16xf32> to vector<16xf32>
    %62 = vector.shape_cast %61 : vector<16xf32> to vector<16x1xf32>
    %63 = vector.broadcast %62 : vector<16x1xf32> to vector<16x16xf32>
    %64 = arith.subf %60, %63 : vector<16x16xf32>
    %65 = math.exp %64 : vector<16x16xf32>
    %cst_26 = arith.constant dense<0.000000e+00> : vector<16xf32>
    %66 = vector.multi_reduction <add>, %65, %cst_26 [1] : vector<16x16xf32> to vector<16xf32>
    %67 = vector.shape_cast %66 : vector<16xf32> to vector<16x1xf32>
    %68 = tpu.reciprocal %67 {approx = true} : vector<16x1xf32> -> vector<16x1xf32>
    %69 = vector.broadcast %68 : vector<16x1xf32> to vector<16x16xf32>
    %70 = arith.mulf %65, %69 : vector<16x16xf32>
    %71 = arith.truncf %70 : vector<16x16xf32> to vector<16x16xbf16>
    %cst_27 = arith.constant dense<0.000000e+00> : vector<16x16xf32>
    %72 = tpu.matmul %71, %56, %cst_27 {dimension_numbers = #tpu.dot_dimension_numbers<[1], [0], [0], [1], [0, 0, 1, 1], [], []>} : vector<16x16xbf16>, vector<16x16xbf16>, vector<16x16xf32> -> vector<16x16xf32>
    %73 = tpu.concatenate %53, %72 in 1 : vector<16x16xf32>, vector<16x16xf32> -> vector<16x32xf32>
    %74 = arith.truncf %73 : vector<16x32xf32> to vector<16x32xbf16>
    %c0_28 = arith.constant 0 : index
    %c0_29 = arith.constant 0 : index
    %c0_30 = arith.constant 0 : index
    %75 = vector.load %arg6[%c0_28, %c0_29, %c0_30] : memref<2x32x32xbf16, #tpu.memory_space<vmem>>, vector<1x32x32xbf16>
    %76 = vector.shape_cast %75 : vector<1x32x32xbf16> to vector<32x32xbf16>
    %cst_31 = arith.constant dense<0.000000e+00> : vector<16x32xf32>
    %77 = tpu.matmul %74, %76, %cst_31 {dimension_numbers = #tpu.dot_dimension_numbers<[1], [0], [0], [1], [0, 0, 1, 1], [], []>} : vector<16x32xbf16>, vector<32x32xbf16>, vector<16x32xf32> -> vector<16x32xf32>
    %c0_32 = arith.constant 0 : index
    %c0_33 = arith.constant 0 : index
    %c0_34 = arith.constant 0 : index
    %78 = vector.load %arg7[%c0_32, %c0_33, %c0_34] : memref<2x1x32xf32, #tpu.memory_space<vmem>>, vector<1x1x32xf32>
    %79 = vector.shape_cast %78 : vector<1x1x32xf32> to vector<1x32xf32>
    %80 = vector.broadcast %79 : vector<1x32xf32> to vector<16x32xf32>
    %81 = arith.addf %77, %80 : vector<16x32xf32>
    %82 = arith.addf %81, %25 : vector<16x32xf32>
    %c0_35 = arith.constant 0 : index
    %c0_36 = arith.constant 0 : index
    %c0_37 = arith.constant 0 : index
    %83 = vector.load %arg8[%c0_35, %c0_36, %c0_37] : memref<2x1x32xf32, #tpu.memory_space<vmem>>, vector<1x1x32xf32>
    %84 = vector.shape_cast %83 : vector<1x1x32xf32> to vector<1x32xf32>
    %c0_38 = arith.constant 0 : index
    %c0_39 = arith.constant 0 : index
    %c0_40 = arith.constant 0 : index
    %85 = vector.load %arg9[%c0_38, %c0_39, %c0_40] : memref<2x1x32xf32, #tpu.memory_space<vmem>>, vector<1x1x32xf32>
    %86 = vector.shape_cast %85 : vector<1x1x32xf32> to vector<1x32xf32>
    %cst_41 = arith.constant dense<0.000000e+00> : vector<16xf32>
    %87 = vector.multi_reduction <add>, %82, %cst_41 [1] : vector<16x32xf32> to vector<16xf32>
    %88 = vector.shape_cast %87 : vector<16xf32> to vector<16x1xf32>
    %cst_42 = arith.constant 3.200000e+01 : f32
    %89 = vector.broadcast %cst_42 : f32 to vector<16x1xf32>
    %90 = arith.divf %88, %89 : vector<16x1xf32>
    %91 = vector.broadcast %90 : vector<16x1xf32> to vector<16x32xf32>
    %92 = arith.subf %82, %91 : vector<16x32xf32>
    %93 = arith.mulf %92, %92 : vector<16x32xf32>
    %cst_43 = arith.constant dense<0.000000e+00> : vector<16xf32>
    %94 = vector.multi_reduction <add>, %93, %cst_43 [1] : vector<16x32xf32> to vector<16xf32>
    %95 = vector.shape_cast %94 : vector<16xf32> to vector<16x1xf32>
    %cst_44 = arith.constant 3.200000e+01 : f32
    %96 = vector.broadcast %cst_44 : f32 to vector<16x1xf32>
    %97 = arith.divf %95, %96 : vector<16x1xf32>
    %98 = vector.broadcast %90 : vector<16x1xf32> to vector<16x32xf32>
    %99 = arith.subf %82, %98 : vector<16x32xf32>
    %cst_45 = arith.constant 9.99999996E-13 : f32
    %100 = vector.broadcast %cst_45 : f32 to vector<16x1xf32>
    %101 = arith.addf %97, %100 : vector<16x1xf32>
    %102 = math.rsqrt %101 : vector<16x1xf32>
    %103 = vector.broadcast %102 : vector<16x1xf32> to vector<16x32xf32>
    %104 = arith.mulf %99, %103 : vector<16x32xf32>
    %105 = vector.broadcast %84 : vector<1x32xf32> to vector<16x32xf32>
    %106 = arith.mulf %104, %105 : vector<16x32xf32>
    %107 = vector.broadcast %86 : vector<1x32xf32> to vector<16x32xf32>
    %108 = arith.addf %106, %107 : vector<16x32xf32>
    %109 = arith.truncf %108 : vector<16x32xf32> to vector<16x32xbf16>
    %c0_46 = arith.constant 0 : index
    %c0_47 = arith.constant 0 : index
    %c0_48 = arith.constant 0 : index
    %110 = vector.load %arg10[%c0_46, %c0_47, %c0_48] : memref<2x32x64xbf16, #tpu.memory_space<vmem>>, vector<1x32x64xbf16>
    %111 = vector.shape_cast %110 : vector<1x32x64xbf16> to vector<32x64xbf16>
    %cst_49 = arith.constant dense<0.000000e+00> : vector<16x64xf32>
    %112 = tpu.matmul %109, %111, %cst_49 {dimension_numbers = #tpu.dot_dimension_numbers<[1], [0], [0], [1], [0, 0, 1, 1], [], []>} : vector<16x32xbf16>, vector<32x64xbf16>, vector<16x64xf32> -> vector<16x64xf32>
    %c0_50 = arith.constant 0 : index
    %c0_51 = arith.constant 0 : index
    %c0_52 = arith.constant 0 : index
    %113 = vector.load %arg11[%c0_50, %c0_51, %c0_52] : memref<2x1x64xf32, #tpu.memory_space<vmem>>, vector<1x1x64xf32>
    %114 = vector.shape_cast %113 : vector<1x1x64xf32> to vector<1x64xf32>
    %115 = vector.broadcast %114 : vector<1x64xf32> to vector<16x64xf32>
    %116 = arith.addf %112, %115 : vector<16x64xf32>
    %cst_53 = arith.constant 5.000000e-01 : f32
    %117 = vector.broadcast %cst_53 : f32 to vector<16x64xf32>
    %118 = arith.mulf %117, %116 : vector<16x64xf32>
    %cst_54 = arith.constant 0.707106769 : f32
    %119 = vector.broadcast %cst_54 : f32 to vector<16x64xf32>
    %120 = arith.mulf %116, %119 : vector<16x64xf32>
    %121 = math.absf %120 : vector<16x64xf32>
    %cst_55 = arith.constant 0.327591091 : f32
    %122 = vector.broadcast %cst_55 : f32 to vector<16x64xf32>
    %123 = arith.mulf %122, %121 : vector<16x64xf32>
    %cst_56 = arith.constant 1.000000e+00 : f32
    %124 = vector.broadcast %cst_56 : f32 to vector<16x64xf32>
    %125 = arith.addf %124, %123 : vector<16x64xf32>
    %cst_57 = arith.constant 1.000000e+00 : f32
    %126 = vector.broadcast %cst_57 : f32 to vector<16x64xf32>
    %127 = arith.divf %126, %125 : vector<16x64xf32>
    %cst_58 = arith.constant 1.06140542 : f32
    %128 = vector.broadcast %cst_58 : f32 to vector<16x64xf32>
    %129 = arith.mulf %128, %127 : vector<16x64xf32>
    %cst_59 = arith.constant -1.45315206 : f32
    %130 = vector.broadcast %cst_59 : f32 to vector<16x64xf32>
    %131 = arith.addf %129, %130 : vector<16x64xf32>
    %132 = arith.mulf %131, %127 : vector<16x64xf32>
    %cst_60 = arith.constant 1.42141378 : f32
    %133 = vector.broadcast %cst_60 : f32 to vector<16x64xf32>
    %134 = arith.addf %132, %133 : vector<16x64xf32>
    %135 = arith.mulf %134, %127 : vector<16x64xf32>
    %cst_61 = arith.constant -0.284496725 : f32
    %136 = vector.broadcast %cst_61 : f32 to vector<16x64xf32>
    %137 = arith.addf %135, %136 : vector<16x64xf32>
    %138 = arith.mulf %137, %127 : vector<16x64xf32>
    %cst_62 = arith.constant 0.254829586 : f32
    %139 = vector.broadcast %cst_62 : f32 to vector<16x64xf32>
    %140 = arith.addf %138, %139 : vector<16x64xf32>
    %141 = arith.mulf %140, %127 : vector<16x64xf32>
    %cst_63 = arith.constant 0.000000e+00 : f32
    %142 = vector.broadcast %cst_63 : f32 to vector<16x64xf32>
    %143 = arith.subf %142, %121 : vector<16x64xf32>
    %144 = arith.mulf %143, %121 : vector<16x64xf32>
    %145 = math.exp %144 : vector<16x64xf32>
    %146 = arith.mulf %141, %145 : vector<16x64xf32>
    %cst_64 = arith.constant 1.000000e+00 : f32
    %147 = vector.broadcast %cst_64 : f32 to vector<16x64xf32>
    %148 = arith.subf %147, %146 : vector<16x64xf32>
    %cst_65 = arith.constant 0.000000e+00 : f32
    %149 = vector.broadcast %cst_65 : f32 to vector<16x64xf32>
    %150 = arith.cmpf oge, %120, %149 : vector<16x64xf32>
    %cst_66 = arith.constant 0.000000e+00 : f32
    %151 = vector.broadcast %cst_66 : f32 to vector<16x64xf32>
    %152 = arith.subf %151, %148 : vector<16x64xf32>
    %153 = arith.select %150, %148, %152 : vector<16x64xi1>, vector<16x64xf32>
    %cst_67 = arith.constant 1.000000e+00 : f32
    %154 = vector.broadcast %cst_67 : f32 to vector<16x64xf32>
    %155 = arith.addf %154, %153 : vector<16x64xf32>
    %156 = arith.mulf %118, %155 : vector<16x64xf32>
    %157 = arith.truncf %156 : vector<16x64xf32> to vector<16x64xbf16>
    %c0_68 = arith.constant 0 : index
    %c0_69 = arith.constant 0 : index
    %c0_70 = arith.constant 0 : index
    %158 = vector.load %arg12[%c0_68, %c0_69, %c0_70] : memref<2x64x32xbf16, #tpu.memory_space<vmem>>, vector<1x64x32xbf16>
    %159 = vector.shape_cast %158 : vector<1x64x32xbf16> to vector<64x32xbf16>
    %cst_71 = arith.constant dense<0.000000e+00> : vector<16x32xf32>
    %160 = tpu.matmul %157, %159, %cst_71 {dimension_numbers = #tpu.dot_dimension_numbers<[1], [0], [0], [1], [0, 0, 1, 1], [], []>} : vector<16x64xbf16>, vector<64x32xbf16>, vector<16x32xf32> -> vector<16x32xf32>
    %c0_72 = arith.constant 0 : index
    %c0_73 = arith.constant 0 : index
    %c0_74 = arith.constant 0 : index
    %161 = vector.load %arg13[%c0_72, %c0_73, %c0_74] : memref<2x1x32xf32, #tpu.memory_space<vmem>>, vector<1x1x32xf32>
    %162 = vector.shape_cast %161 : vector<1x1x32xf32> to vector<1x32xf32>
    %163 = vector.broadcast %162 : vector<1x32xf32> to vector<16x32xf32>
    %164 = arith.addf %160, %163 : vector<16x32xf32>
    %165 = arith.addf %164, %108 : vector<16x32xf32>
    %c0_75 = arith.constant 0 : index
    %c0_76 = arith.constant 0 : index
    %c0_77 = arith.constant 0 : index
    %166 = vector.load %arg14[%c0_75, %c0_76, %c0_77] : memref<2x1x32xf32, #tpu.memory_space<vmem>>, vector<1x1x32xf32>
    %167 = vector.shape_cast %166 : vector<1x1x32xf32> to vector<1x32xf32>
    %c0_78 = arith.constant 0 : index
    %c0_79 = arith.constant 0 : index
    %c0_80 = arith.constant 0 : index
    %168 = vector.load %arg15[%c0_78, %c0_79, %c0_80] : memref<2x1x32xf32, #tpu.memory_space<vmem>>, vector<1x1x32xf32>
    %169 = vector.shape_cast %168 : vector<1x1x32xf32> to vector<1x32xf32>
    %cst_81 = arith.constant dense<0.000000e+00> : vector<16xf32>
    %170 = vector.multi_reduction <add>, %165, %cst_81 [1] : vector<16x32xf32> to vector<16xf32>
    %171 = vector.shape_cast %170 : vector<16xf32> to vector<16x1xf32>
    %cst_82 = arith.constant 3.200000e+01 : f32
    %172 = vector.broadcast %cst_82 : f32 to vector<16x1xf32>
    %173 = arith.divf %171, %172 : vector<16x1xf32>
    %174 = vector.broadcast %173 : vector<16x1xf32> to vector<16x32xf32>
    %175 = arith.subf %165, %174 : vector<16x32xf32>
    %176 = arith.mulf %175, %175 : vector<16x32xf32>
    %cst_83 = arith.constant dense<0.000000e+00> : vector<16xf32>
    %177 = vector.multi_reduction <add>, %176, %cst_83 [1] : vector<16x32xf32> to vector<16xf32>
    %178 = vector.shape_cast %177 : vector<16xf32> to vector<16x1xf32>
    %cst_84 = arith.constant 3.200000e+01 : f32
    %179 = vector.broadcast %cst_84 : f32 to vector<16x1xf32>
    %180 = arith.divf %178, %179 : vector<16x1xf32>
    %181 = vector.broadcast %173 : vector<16x1xf32> to vector<16x32xf32>
    %182 = arith.subf %165, %181 : vector<16x32xf32>
    %cst_85 = arith.constant 9.99999996E-13 : f32
    %183 = vector.broadcast %cst_85 : f32 to vector<16x1xf32>
    %184 = arith.addf %180, %183 : vector<16x1xf32>
    %185 = math.rsqrt %184 : vector<16x1xf32>
    %186 = vector.broadcast %185 : vector<16x1xf32> to vector<16x32xf32>
    %187 = arith.mulf %182, %186 : vector<16x32xf32>
    %188 = vector.broadcast %167 : vector<1x32xf32> to vector<16x32xf32>
    %189 = arith.mulf %187, %188 : vector<16x32xf32>
    %190 = vector.broadcast %169 : vector<1x32xf32> to vector<16x32xf32>
    %191 = arith.addf %189, %190 : vector<16x32xf32>
    %192 = arith.truncf %191 : vector<16x32xf32> to vector<16x32xbf16>
    %c1 = arith.constant 1 : index
    %c0_86 = arith.constant 0 : index
    %c0_87 = arith.constant 0 : index
    %193 = vector.load %arg4[%c1, %c0_86, %c0_87] : memref<2x32x96xbf16, #tpu.memory_space<vmem>>, vector<1x32x96xbf16>
    %194 = vector.shape_cast %193 : vector<1x32x96xbf16> to vector<32x96xbf16>
    %cst_88 = arith.constant dense<0.000000e+00> : vector<16x96xf32>
    %195 = tpu.matmul %192, %194, %cst_88 {dimension_numbers = #tpu.dot_dimension_numbers<[1], [0], [0], [1], [0, 0, 1, 1], [], []>} : vector<16x32xbf16>, vector<32x96xbf16>, vector<16x96xf32> -> vector<16x96xf32>
    %c1_89 = arith.constant 1 : index
    %c0_90 = arith.constant 0 : index
    %c0_91 = arith.constant 0 : index
    %196 = vector.load %arg5[%c1_89, %c0_90, %c0_91] : memref<2x1x96xf32, #tpu.memory_space<vmem>>, vector<1x1x96xf32>
    %197 = vector.shape_cast %196 : vector<1x1x96xf32> to vector<1x96xf32>
    %198 = vector.broadcast %197 : vector<1x96xf32> to vector<16x96xf32>
    %199 = arith.addf %195, %198 : vector<16x96xf32>
    %200 = arith.truncf %199 : vector<16x96xf32> to vector<16x96xbf16>
    %201 = vector.extract_strided_slice %200 {offsets = [0, 0], sizes = [16, 16], strides = [1, 1]} : vector<16x96xbf16> to vector<16x16xbf16>
    %202 = vector.extract_strided_slice %200 {offsets = [0, 32], sizes = [16, 16], strides = [1, 1]} : vector<16x96xbf16> to vector<16x16xbf16>
    %203 = vector.extract_strided_slice %200 {offsets = [0, 64], sizes = [16, 16], strides = [1, 1]} : vector<16x96xbf16> to vector<16x16xbf16>
    %cst_92 = arith.constant dense<0.000000e+00> : vector<16x16xf32>
    %204 = tpu.matmul %201, %202, %cst_92 {dimension_numbers = #tpu.dot_dimension_numbers<[1], [1], [0], [0], [0, 0, 1, 0], [], []>} : vector<16x16xbf16>, vector<16x16xbf16>, vector<16x16xf32> -> vector<16x16xf32>
    %cst_93 = arith.constant 2.500000e-01 : f32
    %205 = vector.broadcast %cst_93 : f32 to vector<16x16xf32>
    %206 = arith.mulf %204, %205 : vector<16x16xf32>
    %207 = arith.addf %206, %0 : vector<16x16xf32>
    %cst_94 = arith.constant dense<0xFF800000> : vector<16xf32>
    %208 = vector.multi_reduction <maximumf>, %207, %cst_94 [1] : vector<16x16xf32> to vector<16xf32>
    %209 = vector.shape_cast %208 : vector<16xf32> to vector<16x1xf32>
    %210 = vector.broadcast %209 : vector<16x1xf32> to vector<16x16xf32>
    %211 = arith.subf %207, %210 : vector<16x16xf32>
    %212 = math.exp %211 : vector<16x16xf32>
    %cst_95 = arith.constant dense<0.000000e+00> : vector<16xf32>
    %213 = vector.multi_reduction <add>, %212, %cst_95 [1] : vector<16x16xf32> to vector<16xf32>
    %214 = vector.shape_cast %213 : vector<16xf32> to vector<16x1xf32>
    %215 = tpu.reciprocal %214 {approx = true} : vector<16x1xf32> -> vector<16x1xf32>
    %216 = vector.broadcast %215 : vector<16x1xf32> to vector<16x16xf32>
    %217 = arith.mulf %212, %216 : vector<16x16xf32>
    %218 = arith.truncf %217 : vector<16x16xf32> to vector<16x16xbf16>
    %cst_96 = arith.constant dense<0.000000e+00> : vector<16x16xf32>
    %219 = tpu.matmul %218, %203, %cst_96 {dimension_numbers = #tpu.dot_dimension_numbers<[1], [0], [0], [1], [0, 0, 1, 1], [], []>} : vector<16x16xbf16>, vector<16x16xbf16>, vector<16x16xf32> -> vector<16x16xf32>
    %220 = vector.extract_strided_slice %200 {offsets = [0, 16], sizes = [16, 16], strides = [1, 1]} : vector<16x96xbf16> to vector<16x16xbf16>
    %221 = vector.extract_strided_slice %200 {offsets = [0, 48], sizes = [16, 16], strides = [1, 1]} : vector<16x96xbf16> to vector<16x16xbf16>
    %222 = vector.extract_strided_slice %200 {offsets = [0, 80], sizes = [16, 16], strides = [1, 1]} : vector<16x96xbf16> to vector<16x16xbf16>
    %cst_97 = arith.constant dense<0.000000e+00> : vector<16x16xf32>
    %223 = tpu.matmul %220, %221, %cst_97 {dimension_numbers = #tpu.dot_dimension_numbers<[1], [1], [0], [0], [0, 0, 1, 0], [], []>} : vector<16x16xbf16>, vector<16x16xbf16>, vector<16x16xf32> -> vector<16x16xf32>
    %cst_98 = arith.constant 2.500000e-01 : f32
    %224 = vector.broadcast %cst_98 : f32 to vector<16x16xf32>
    %225 = arith.mulf %223, %224 : vector<16x16xf32>
    %226 = arith.addf %225, %0 : vector<16x16xf32>
    %cst_99 = arith.constant dense<0xFF800000> : vector<16xf32>
    %227 = vector.multi_reduction <maximumf>, %226, %cst_99 [1] : vector<16x16xf32> to vector<16xf32>
    %228 = vector.shape_cast %227 : vector<16xf32> to vector<16x1xf32>
    %229 = vector.broadcast %228 : vector<16x1xf32> to vector<16x16xf32>
    %230 = arith.subf %226, %229 : vector<16x16xf32>
    %231 = math.exp %230 : vector<16x16xf32>
    %cst_100 = arith.constant dense<0.000000e+00> : vector<16xf32>
    %232 = vector.multi_reduction <add>, %231, %cst_100 [1] : vector<16x16xf32> to vector<16xf32>
    %233 = vector.shape_cast %232 : vector<16xf32> to vector<16x1xf32>
    %234 = tpu.reciprocal %233 {approx = true} : vector<16x1xf32> -> vector<16x1xf32>
    %235 = vector.broadcast %234 : vector<16x1xf32> to vector<16x16xf32>
    %236 = arith.mulf %231, %235 : vector<16x16xf32>
    %237 = arith.truncf %236 : vector<16x16xf32> to vector<16x16xbf16>
    %cst_101 = arith.constant dense<0.000000e+00> : vector<16x16xf32>
    %238 = tpu.matmul %237, %222, %cst_101 {dimension_numbers = #tpu.dot_dimension_numbers<[1], [0], [0], [1], [0, 0, 1, 1], [], []>} : vector<16x16xbf16>, vector<16x16xbf16>, vector<16x16xf32> -> vector<16x16xf32>
    %239 = tpu.concatenate %219, %238 in 1 : vector<16x16xf32>, vector<16x16xf32> -> vector<16x32xf32>
    %240 = arith.truncf %239 : vector<16x32xf32> to vector<16x32xbf16>
    %c1_102 = arith.constant 1 : index
    %c0_103 = arith.constant 0 : index
    %c0_104 = arith.constant 0 : index
    %241 = vector.load %arg6[%c1_102, %c0_103, %c0_104] : memref<2x32x32xbf16, #tpu.memory_space<vmem>>, vector<1x32x32xbf16>
    %242 = vector.shape_cast %241 : vector<1x32x32xbf16> to vector<32x32xbf16>
    %cst_105 = arith.constant dense<0.000000e+00> : vector<16x32xf32>
    %243 = tpu.matmul %240, %242, %cst_105 {dimension_numbers = #tpu.dot_dimension_numbers<[1], [0], [0], [1], [0, 0, 1, 1], [], []>} : vector<16x32xbf16>, vector<32x32xbf16>, vector<16x32xf32> -> vector<16x32xf32>
    %c1_106 = arith.constant 1 : index
    %c0_107 = arith.constant 0 : index
    %c0_108 = arith.constant 0 : index
    %244 = vector.load %arg7[%c1_106, %c0_107, %c0_108] : memref<2x1x32xf32, #tpu.memory_space<vmem>>, vector<1x1x32xf32>
    %245 = vector.shape_cast %244 : vector<1x1x32xf32> to vector<1x32xf32>
    %246 = vector.broadcast %245 : vector<1x32xf32> to vector<16x32xf32>
    %247 = arith.addf %243, %246 : vector<16x32xf32>
    %248 = arith.addf %247, %191 : vector<16x32xf32>
    %c1_109 = arith.constant 1 : index
    %c0_110 = arith.constant 0 : index
    %c0_111 = arith.constant 0 : index
    %249 = vector.load %arg8[%c1_109, %c0_110, %c0_111] : memref<2x1x32xf32, #tpu.memory_space<vmem>>, vector<1x1x32xf32>
    %250 = vector.shape_cast %249 : vector<1x1x32xf32> to vector<1x32xf32>
    %c1_112 = arith.constant 1 : index
    %c0_113 = arith.constant 0 : index
    %c0_114 = arith.constant 0 : index
    %251 = vector.load %arg9[%c1_112, %c0_113, %c0_114] : memref<2x1x32xf32, #tpu.memory_space<vmem>>, vector<1x1x32xf32>
    %252 = vector.shape_cast %251 : vector<1x1x32xf32> to vector<1x32xf32>
    %cst_115 = arith.constant dense<0.000000e+00> : vector<16xf32>
    %253 = vector.multi_reduction <add>, %248, %cst_115 [1] : vector<16x32xf32> to vector<16xf32>
    %254 = vector.shape_cast %253 : vector<16xf32> to vector<16x1xf32>
    %cst_116 = arith.constant 3.200000e+01 : f32
    %255 = vector.broadcast %cst_116 : f32 to vector<16x1xf32>
    %256 = arith.divf %254, %255 : vector<16x1xf32>
    %257 = vector.broadcast %256 : vector<16x1xf32> to vector<16x32xf32>
    %258 = arith.subf %248, %257 : vector<16x32xf32>
    %259 = arith.mulf %258, %258 : vector<16x32xf32>
    %cst_117 = arith.constant dense<0.000000e+00> : vector<16xf32>
    %260 = vector.multi_reduction <add>, %259, %cst_117 [1] : vector<16x32xf32> to vector<16xf32>
    %261 = vector.shape_cast %260 : vector<16xf32> to vector<16x1xf32>
    %cst_118 = arith.constant 3.200000e+01 : f32
    %262 = vector.broadcast %cst_118 : f32 to vector<16x1xf32>
    %263 = arith.divf %261, %262 : vector<16x1xf32>
    %264 = vector.broadcast %256 : vector<16x1xf32> to vector<16x32xf32>
    %265 = arith.subf %248, %264 : vector<16x32xf32>
    %cst_119 = arith.constant 9.99999996E-13 : f32
    %266 = vector.broadcast %cst_119 : f32 to vector<16x1xf32>
    %267 = arith.addf %263, %266 : vector<16x1xf32>
    %268 = math.rsqrt %267 : vector<16x1xf32>
    %269 = vector.broadcast %268 : vector<16x1xf32> to vector<16x32xf32>
    %270 = arith.mulf %265, %269 : vector<16x32xf32>
    %271 = vector.broadcast %250 : vector<1x32xf32> to vector<16x32xf32>
    %272 = arith.mulf %270, %271 : vector<16x32xf32>
    %273 = vector.broadcast %252 : vector<1x32xf32> to vector<16x32xf32>
    %274 = arith.addf %272, %273 : vector<16x32xf32>
    %275 = arith.truncf %274 : vector<16x32xf32> to vector<16x32xbf16>
    %c1_120 = arith.constant 1 : index
    %c0_121 = arith.constant 0 : index
    %c0_122 = arith.constant 0 : index
    %276 = vector.load %arg10[%c1_120, %c0_121, %c0_122] : memref<2x32x64xbf16, #tpu.memory_space<vmem>>, vector<1x32x64xbf16>
    %277 = vector.shape_cast %276 : vector<1x32x64xbf16> to vector<32x64xbf16>
    %cst_123 = arith.constant dense<0.000000e+00> : vector<16x64xf32>
    %278 = tpu.matmul %275, %277, %cst_123 {dimension_numbers = #tpu.dot_dimension_numbers<[1], [0], [0], [1], [0, 0, 1, 1], [], []>} : vector<16x32xbf16>, vector<32x64xbf16>, vector<16x64xf32> -> vector<16x64xf32>
    %c1_124 = arith.constant 1 : index
    %c0_125 = arith.constant 0 : index
    %c0_126 = arith.constant 0 : index
    %279 = vector.load %arg11[%c1_124, %c0_125, %c0_126] : memref<2x1x64xf32, #tpu.memory_space<vmem>>, vector<1x1x64xf32>
    %280 = vector.shape_cast %279 : vector<1x1x64xf32> to vector<1x64xf32>
    %281 = vector.broadcast %280 : vector<1x64xf32> to vector<16x64xf32>
    %282 = arith.addf %278, %281 : vector<16x64xf32>
    %cst_127 = arith.constant 5.000000e-01 : f32
    %283 = vector.broadcast %cst_127 : f32 to vector<16x64xf32>
    %284 = arith.mulf %283, %282 : vector<16x64xf32>
    %cst_128 = arith.constant 0.707106769 : f32
    %285 = vector.broadcast %cst_128 : f32 to vector<16x64xf32>
    %286 = arith.mulf %282, %285 : vector<16x64xf32>
    %287 = math.absf %286 : vector<16x64xf32>
    %cst_129 = arith.constant 0.327591091 : f32
    %288 = vector.broadcast %cst_129 : f32 to vector<16x64xf32>
    %289 = arith.mulf %288, %287 : vector<16x64xf32>
    %cst_130 = arith.constant 1.000000e+00 : f32
    %290 = vector.broadcast %cst_130 : f32 to vector<16x64xf32>
    %291 = arith.addf %290, %289 : vector<16x64xf32>
    %cst_131 = arith.constant 1.000000e+00 : f32
    %292 = vector.broadcast %cst_131 : f32 to vector<16x64xf32>
    %293 = arith.divf %292, %291 : vector<16x64xf32>
    %cst_132 = arith.constant 1.06140542 : f32
    %294 = vector.broadcast %cst_132 : f32 to vector<16x64xf32>
    %295 = arith.mulf %294, %293 : vector<16x64xf32>
    %cst_133 = arith.constant -1.45315206 : f32
    %296 = vector.broadcast %cst_133 : f32 to vector<16x64xf32>
    %297 = arith.addf %295, %296 : vector<16x64xf32>
    %298 = arith.mulf %297, %293 : vector<16x64xf32>
    %cst_134 = arith.constant 1.42141378 : f32
    %299 = vector.broadcast %cst_134 : f32 to vector<16x64xf32>
    %300 = arith.addf %298, %299 : vector<16x64xf32>
    %301 = arith.mulf %300, %293 : vector<16x64xf32>
    %cst_135 = arith.constant -0.284496725 : f32
    %302 = vector.broadcast %cst_135 : f32 to vector<16x64xf32>
    %303 = arith.addf %301, %302 : vector<16x64xf32>
    %304 = arith.mulf %303, %293 : vector<16x64xf32>
    %cst_136 = arith.constant 0.254829586 : f32
    %305 = vector.broadcast %cst_136 : f32 to vector<16x64xf32>
    %306 = arith.addf %304, %305 : vector<16x64xf32>
    %307 = arith.mulf %306, %293 : vector<16x64xf32>
    %cst_137 = arith.constant 0.000000e+00 : f32
    %308 = vector.broadcast %cst_137 : f32 to vector<16x64xf32>
    %309 = arith.subf %308, %287 : vector<16x64xf32>
    %310 = arith.mulf %309, %287 : vector<16x64xf32>
    %311 = math.exp %310 : vector<16x64xf32>
    %312 = arith.mulf %307, %311 : vector<16x64xf32>
    %cst_138 = arith.constant 1.000000e+00 : f32
    %313 = vector.broadcast %cst_138 : f32 to vector<16x64xf32>
    %314 = arith.subf %313, %312 : vector<16x64xf32>
    %cst_139 = arith.constant 0.000000e+00 : f32
    %315 = vector.broadcast %cst_139 : f32 to vector<16x64xf32>
    %316 = arith.cmpf oge, %286, %315 : vector<16x64xf32>
    %cst_140 = arith.constant 0.000000e+00 : f32
    %317 = vector.broadcast %cst_140 : f32 to vector<16x64xf32>
    %318 = arith.subf %317, %314 : vector<16x64xf32>
    %319 = arith.select %316, %314, %318 : vector<16x64xi1>, vector<16x64xf32>
    %cst_141 = arith.constant 1.000000e+00 : f32
    %320 = vector.broadcast %cst_141 : f32 to vector<16x64xf32>
    %321 = arith.addf %320, %319 : vector<16x64xf32>
    %322 = arith.mulf %284, %321 : vector<16x64xf32>
    %323 = arith.truncf %322 : vector<16x64xf32> to vector<16x64xbf16>
    %c1_142 = arith.constant 1 : index
    %c0_143 = arith.constant 0 : index
    %c0_144 = arith.constant 0 : index
    %324 = vector.load %arg12[%c1_142, %c0_143, %c0_144] : memref<2x64x32xbf16, #tpu.memory_space<vmem>>, vector<1x64x32xbf16>
    %325 = vector.shape_cast %324 : vector<1x64x32xbf16> to vector<64x32xbf16>
    %cst_145 = arith.constant dense<0.000000e+00> : vector<16x32xf32>
    %326 = tpu.matmul %323, %325, %cst_145 {dimension_numbers = #tpu.dot_dimension_numbers<[1], [0], [0], [1], [0, 0, 1, 1], [], []>} : vector<16x64xbf16>, vector<64x32xbf16>, vector<16x32xf32> -> vector<16x32xf32>
    %c1_146 = arith.constant 1 : index
    %c0_147 = arith.constant 0 : index
    %c0_148 = arith.constant 0 : index
    %327 = vector.load %arg13[%c1_146, %c0_147, %c0_148] : memref<2x1x32xf32, #tpu.memory_space<vmem>>, vector<1x1x32xf32>
    %328 = vector.shape_cast %327 : vector<1x1x32xf32> to vector<1x32xf32>
    %329 = vector.broadcast %328 : vector<1x32xf32> to vector<16x32xf32>
    %330 = arith.addf %326, %329 : vector<16x32xf32>
    %331 = arith.addf %330, %274 : vector<16x32xf32>
    %c1_149 = arith.constant 1 : index
    %c0_150 = arith.constant 0 : index
    %c0_151 = arith.constant 0 : index
    %332 = vector.load %arg14[%c1_149, %c0_150, %c0_151] : memref<2x1x32xf32, #tpu.memory_space<vmem>>, vector<1x1x32xf32>
    %333 = vector.shape_cast %332 : vector<1x1x32xf32> to vector<1x32xf32>
    %c1_152 = arith.constant 1 : index
    %c0_153 = arith.constant 0 : index
    %c0_154 = arith.constant 0 : index
    %334 = vector.load %arg15[%c1_152, %c0_153, %c0_154] : memref<2x1x32xf32, #tpu.memory_space<vmem>>, vector<1x1x32xf32>
    %335 = vector.shape_cast %334 : vector<1x1x32xf32> to vector<1x32xf32>
    %cst_155 = arith.constant dense<0.000000e+00> : vector<16xf32>
    %336 = vector.multi_reduction <add>, %331, %cst_155 [1] : vector<16x32xf32> to vector<16xf32>
    %337 = vector.shape_cast %336 : vector<16xf32> to vector<16x1xf32>
    %cst_156 = arith.constant 3.200000e+01 : f32
    %338 = vector.broadcast %cst_156 : f32 to vector<16x1xf32>
    %339 = arith.divf %337, %338 : vector<16x1xf32>
    %340 = vector.broadcast %339 : vector<16x1xf32> to vector<16x32xf32>
    %341 = arith.subf %331, %340 : vector<16x32xf32>
    %342 = arith.mulf %341, %341 : vector<16x32xf32>
    %cst_157 = arith.constant dense<0.000000e+00> : vector<16xf32>
    %343 = vector.multi_reduction <add>, %342, %cst_157 [1] : vector<16x32xf32> to vector<16xf32>
    %344 = vector.shape_cast %343 : vector<16xf32> to vector<16x1xf32>
    %cst_158 = arith.constant 3.200000e+01 : f32
    %345 = vector.broadcast %cst_158 : f32 to vector<16x1xf32>
    %346 = arith.divf %344, %345 : vector<16x1xf32>
    %347 = vector.broadcast %339 : vector<16x1xf32> to vector<16x32xf32>
    %348 = arith.subf %331, %347 : vector<16x32xf32>
    %cst_159 = arith.constant 9.99999996E-13 : f32
    %349 = vector.broadcast %cst_159 : f32 to vector<16x1xf32>
    %350 = arith.addf %346, %349 : vector<16x1xf32>
    %351 = math.rsqrt %350 : vector<16x1xf32>
    %352 = vector.broadcast %351 : vector<16x1xf32> to vector<16x32xf32>
    %353 = arith.mulf %348, %352 : vector<16x32xf32>
    %354 = vector.broadcast %333 : vector<1x32xf32> to vector<16x32xf32>
    %355 = arith.mulf %353, %354 : vector<16x32xf32>
    %356 = vector.broadcast %335 : vector<1x32xf32> to vector<16x32xf32>
    %357 = arith.addf %355, %356 : vector<16x32xf32>
    %c0_160 = arith.constant 0 : index
    %c0_161 = arith.constant 0 : index
    %358 = vector.load %arg16[%c0_160, %c0_161] : memref<16x32xf32, #tpu.memory_space<vmem>>, vector<16x32xf32>
    tpu.vector_store %arg16[%c0_160, %c0_161], %357 {strides = array<i32>} : memref<16x32xf32, #tpu.memory_space<vmem>>, vector<16x32xf32>,
    return
  }
}

</mosaic_0001>

<llo_original>
// kernel: bert_forward.1
$region0: #{bert_forward.1}
  #allocation0 [shape = 'u32[]', space=smem, size = 0x4, offset = 0x4, fixed_abs, tag = 'smem constant byte address 0x4 - core index']
  #allocation1 [shape = 'u32[144,128]{1,0:T(1,128)}', space=vmem, size = 0x12000, scoped, tag = 'internal scratch']
  %s0 = inlined_call_operand.vmem [shape: f32[16,32], index: 0, kind: input, shape index: {}]
  %s1 = inlined_call_operand.vmem [shape: f32[16,16], index: 1, kind: input, shape index: {}]
  %s2 = inlined_call_operand.vmem [shape: f32[1,32], index: 2, kind: input, shape index: {}]
  %s3 = inlined_call_operand.vmem [shape: f32[1,32], index: 3, kind: input, shape index: {}]
  %s4 = inlined_call_operand.vmem [shape: bf16[2,32,96], index: 4, kind: input, shape index: {}]
  %s5 = inlined_call_operand.vmem [shape: f32[2,1,96], index: 5, kind: input, shape index: {}]
  %s6 = inlined_call_operand.vmem [shape: bf16[2,32,32], index: 6, kind: input, shape index: {}]
  %s7 = inlined_call_operand.vmem [shape: f32[2,1,32], index: 7, kind: input, shape index: {}]
  %s8 = inlined_call_operand.vmem [shape: f32[2,1,32], index: 8, kind: input, shape index: {}]
  %s9 = inlined_call_operand.vmem [shape: f32[2,1,32], index: 9, kind: input, shape index: {}]
  %s10 = inlined_call_operand.vmem [shape: bf16[2,32,64], index: 10, kind: input, shape index: {}]
  %s11 = inlined_call_operand.vmem [shape: f32[2,1,64], index: 11, kind: input, shape index: {}]
  %s12 = inlined_call_operand.vmem [shape: bf16[2,64,32], index: 12, kind: input, shape index: {}]
  %s13 = inlined_call_operand.vmem [shape: f32[2,1,32], index: 13, kind: input, shape index: {}]
  %s14 = inlined_call_operand.vmem [shape: f32[2,1,32], index: 14, kind: input, shape index: {}]
  %s15 = inlined_call_operand.vmem [shape: f32[2,1,32], index: 15, kind: input, shape index: {}]
  %s16 = inlined_call_operand.hbm [shape: f32[16,32], index: 16, kind: output, shape index: {}]
  %s17 = sld [smem:[#allocation0]]
  $region74: #{bert_forward.1} parent=0
    _
  %s19 = ssub.s32 1, %s17
  %s20 = scalar_select 0, %s19, %s17
  $region1: #{bert_forward.1} parent=0
    #allocation2 [shape = 'u8[8192]{0}', space=vmem, size = 0x2000, scoped, tag = 'output window, operand 0, single buffered']
    #allocation3 [shape = 's32[1]{0}', space=sflag, size = 0x4, scoped, tag = 'scoped memory for bert_forward.1']
    %21 = vsyncpa [#allocation3], 0
    // Predicated region
    $region2: #{bert_forward.1} parent=1 // pred_check
      _
    $region3: #{bert_forward.1} parent=1 // pred_check_branch
      %23 = sbr.rel (0) target = $region5
    $region4: #{bert_forward.1} parent=1 // pred_region
      _
    $region5: #{bert_forward.1} parent=1 // pred_fallthru
      _
    // Predicated region
    $region6: #{bert_forward.1} parent=1 // pred_check
      _
    $region7: #{bert_forward.1} parent=1 // pred_check_branch
      %25 = sbr.rel (0) target = $region9
    $region8: #{bert_forward.1} parent=1 // pred_region
      _
    $region9: #{bert_forward.1} parent=1 // pred_fallthru
      _
    // Predicated region
    $region10: #{bert_forward.1} parent=1 // pred_check
      _
    $region11: #{bert_forward.1} parent=1 // pred_check_branch
      %27 = sbr.rel (0) target = $region13
    $region12: #{bert_forward.1} parent=1 // pred_region
      _
    $region13: #{bert_forward.1} parent=1 // pred_fallthru
      _
    // Predicated region
    $region14: #{bert_forward.1} parent=1 // pred_check
      _
    $region15: #{bert_forward.1} parent=1 // pred_check_branch
      %29 = sbr.rel (0) target = $region17
    $region16: #{bert_forward.1} parent=1 // pred_region
      _
    $region17: #{bert_forward.1} parent=1 // pred_fallthru
      _
    // Predicated region
    $region18: #{bert_forward.1} parent=1 // pred_check
      _
    $region19: #{bert_forward.1} parent=1 // pred_check_branch
      %31 = sbr.rel (0) target = $region21
    $region20: #{bert_forward.1} parent=1 // pred_region
      _
    $region21: #{bert_forward.1} parent=1 // pred_fallthru
      _
    // Predicated region
    $region22: #{bert_forward.1} parent=1 // pred_check
      _
    $region23: #{bert_forward.1} parent=1 // pred_check_branch
      %33 = sbr.rel (0) target = $region25
    $region24: #{bert_forward.1} parent=1 // pred_region
      _
    $region25: #{bert_forward.1} parent=1 // pred_fallthru
      _
    // Predicated region
    $region26: #{bert_forward.1} parent=1 // pred_check
      _
    $region27: #{bert_forward.1} parent=1 // pred_check_branch
      %35 = sbr.rel (0) target = $region29
    $region28: #{bert_forward.1} parent=1 // pred_region
      _
    $region29: #{bert_forward.1} parent=1 // pred_fallthru
      _
    // Predicated region
    $region30: #{bert_forward.1} parent=1 // pred_check
      _
    $region31: #{bert_forward.1} parent=1 // pred_check_branch
      %37 = sbr.rel (0) target = $region33
    $region32: #{bert_forward.1} parent=1 // pred_region
      _
    $region33: #{bert_forward.1} parent=1 // pred_fallthru
      _
    // Predicated region
    $region34: #{bert_forward.1} parent=1 // pred_check
      _
    $region35: #{bert_forward.1} parent=1 // pred_check_branch
      %39 = sbr.rel (0) target = $region37
    $region36: #{bert_forward.1} parent=1 // pred_region
      _
    $region37: #{bert_forward.1} parent=1 // pred_fallthru
      _
    // Predicated region
    $region38: #{bert_forward.1} parent=1 // pred_check
      _
    $region39: #{bert_forward.1} parent=1 // pred_check_branch
      %41 = sbr.rel (0) target = $region41
    $region40: #{bert_forward.1} parent=1 // pred_region
      _
    $region41: #{bert_forward.1} parent=1 // pred_fallthru
      _
    // Predicated region
    $region42: #{bert_forward.1} parent=1 // pred_check
      _
    $region43: #{bert_forward.1} parent=1 // pred_check_branch
      %43 = sbr.rel (0) target = $region45
    $region44: #{bert_forward.1} parent=1 // pred_region
      _
    $region45: #{bert_forward.1} parent=1 // pred_fallthru
      _
    // Predicated region
    $region46: #{bert_forward.1} parent=1 // pred_check
      _
    $region47: #{bert_forward.1} parent=1 // pred_check_branch
      %45 = sbr.rel (0) target = $region49
    $region48: #{bert_forward.1} parent=1 // pred_region
      _
    $region49: #{bert_forward.1} parent=1 // pred_fallthru
      _
    // Predicated region
    $region50: #{bert_forward.1} parent=1 // pred_check
      _
    $region51: #{bert_forward.1} parent=1 // pred_check_branch
      %47 = sbr.rel (0) target = $region53
    $region52: #{bert_forward.1} parent=1 // pred_region
      _
    $region53: #{bert_forward.1} parent=1 // pred_fallthru
      _
    // Predicated region
    $region54: #{bert_forward.1} parent=1 // pred_check
      _
    $region55: #{bert_forward.1} parent=1 // pred_check_branch
      %49 = sbr.rel (0) target = $region57
    $region56: #{bert_forward.1} parent=1 // pred_region
      _
    $region57: #{bert_forward.1} parent=1 // pred_fallthru
      _
    // Predicated region
    $region58: #{bert_forward.1} parent=1 // pred_check
      _
    $region59: #{bert_forward.1} parent=1 // pred_check_branch
      %51 = sbr.rel (0) target = $region61
    $region60: #{bert_forward.1} parent=1 // pred_region
      _
    $region61: #{bert_forward.1} parent=1 // pred_fallthru
      _
    // Predicated region
    $region62: #{bert_forward.1} parent=1 // pred_check
      _
    $region63: #{bert_forward.1} parent=1 // pred_check_branch
      %53 = sbr.rel (0) target = $region65
    $region64: #{bert_forward.1} parent=1 // pred_region
      _
    $region65: #{bert_forward.1} parent=1 // pred_fallthru
      _
    %v55 = vld [vmem:[%s1] sm:$0xff]
    %v56 = vld [vmem:[%s1 + $0x8] sm:$0xff]
    %v57 = vld [vmem:[%s0] sm:$0xff]
    %v58 = vld [vmem:[%s0 + $0x8] sm:$0xff]
    %v59 = vld [vmem:[%s2] sm:$0x1]
    %v60 = vld [vmem:[%s3] sm:$0x1]
    %vm61 = vcmask 261120
    %v62 = vsel %vm61, %v57, 0.0
    %63 = vadd.xlane.f32.xlu0 %v62
    %v64 = vpop.xlane.xlu0 %63
    %v65 = vsel %vm61, %v58, 0.0
    %66 = vadd.xlane.f32.xlu0 %v65
    %v67 = vpop.xlane.xlu0 %66
    %v68 = vrcp.pop 32.0
    %v69 = vmul.f32 %v64, %v68
    %v70 = vmul.f32 %v67, %v68
    %v71 = vsub.f32 %v57, %v69
    %v72 = vsub.f32 %v58, %v70
    %v73 = vmul.f32 %v71, %v71
    %v74 = vmul.f32 %v72, %v72
    %v75 = vsel %vm61, %v73, 0.0
    %76 = vadd.xlane.f32.xlu0 %v75
    %v77 = vpop.xlane.xlu0 %76
    %v78 = vsel %vm61, %v74, 0.0
    %79 = vadd.xlane.f32.xlu0 %v78
    %v80 = vpop.xlane.xlu0 %79
    %v81 = vmul.f32 %v77, %v68
    %v82 = vmul.f32 %v80, %v68
    %v83 = vadd.f32 %v81, 1e-12
    %v84 = vadd.f32 %v82, 1e-12
    %v85 = vrsqrt.pop %v83
    %v86 = vrsqrt.pop %v84
    %v87 = vmul.f32 %v71, %v85
    %v88 = vmul.f32 %v72, %v86
    %v90 = vlaneseq
    %v91 = vshrl.u32 %v90, 7
    %v92 = vsub.s32 0, %v91
    %v93 = vrot.slane %v59, %v92
    %v95 = vmul.f32 %v87, %v93
    %v96 = vmul.f32 %v88, %v93
    %v98 = vlaneseq
    %v99 = vshrl.u32 %v98, 7
    %v100 = vsub.s32 0, %v99
    %v101 = vrot.slane %v60, %v100
    %v103 = vadd.f32 %v95, %v101
    %v104 = vadd.f32 %v96, %v101
    %v105 = vpack.c.bf16 %v104, %v103
    %v106 = vld [vmem:[%s4] sm:$0xf]
    %v107 = vld [vmem:[%s4 + $0x4] sm:$0xf]
    %v108 = vld [vmem:[%s4 + $0x8] sm:$0xf]
    %v109 = vld [vmem:[%s4 + $0xc] sm:$0xf]
    %v110 = vld [vmem:[%s5] sm:$0x1]
    %v112 = vlaneseq
    %v113 = vshrl.u32 %v112, 7
    %v114 = vsub.s32 0, %v113
    %v115 = vrot.slane %v110, %v114
    %v121 = vunpack.c.l.b16 %v106
    %v122 = vunpack.c.l.b16 %v107
    %v123 = vunpack.c.l.b16 %v108
    %v124 = vunpack.c.l.b16 %v109
    %v125 = vpack.c.b16 %v122, %v121
    %v126 = vpack.c.b16 %v124, %v123
    %v130 = vsel %vm61, %v105, 0
    %132 = vmatprep.subr.bf16.mxu0 0
    %133 = vmatpush1.bf16.msra.mxu0 0
    %134 = vmatprep.subr.bf16.mxu0 0
    %135 = vmatpush1.bf16.msra.mxu0 0
    %136 = vmatprep.subr.bf16.mxu0 0
    %137 = vmatpush1.bf16.msra.mxu0 0
    %138 = vmatprep.subr.bf16.mxu0 0
    %139 = vmatpush1.bf16.msra.mxu0 0
    %140 = vmatprep.subr.bf16.mxu0 0
    %141 = vmatpush1.bf16.msra.mxu0 0
    %142 = vmatprep.subr.bf16.mxu0 0
    %143 = vmatpush1.bf16.msra.mxu0 0
    %144 = vmatprep.subr.bf16.mxu0 0
    %145 = vmatpush1.bf16.msra.mxu0 %v126
    %146 = vmatprep.subr.bf16.mxu0 0
    %147 = vmatpush1.bf16.msra.mxu0 %v125
    %148 = vmatprep.subr.bf16.mxu0 0
    %149 = vmatpush2.bf16.msra.mxu0 0
    %150 = vmatprep.subr.bf16.mxu0 0
    %151 = vmatpush2.bf16.msra.mxu0 0
    %152 = vmatprep.subr.bf16.mxu0 0
    %153 = vmatpush2.bf16.msra.mxu0 0
    %154 = vmatprep.subr.bf16.mxu0 0
    %155 = vmatpush2.bf16.msra.mxu0 0
    %156 = vmatprep.subr.bf16.mxu0 0
    %157 = vmatpush2.bf16.msra.mxu0 0
    %158 = vmatprep.subr.bf16.mxu0 0
    %159 = vmatpush2.bf16.msra.mxu0 0
    %160 = vmatprep.subr.bf16.mxu0 0
    %161 = vmatpush2.bf16.msra.mxu0 0
    %162 = vmatprep.subr.bf16.mxu0 0
    %163 = vmatpush2.bf16.msra.mxu0 0
    %164 = vmatprep.mubr.bf16.mxu0 0
    %165 = vmatmul.mubr.bf16.gmra.mxu0 %v130
    %v166 = vpop.f32.mrf.mxu0
    %v167 = vadd.f32 %v115, %v166
    %v168 = vpop.f32.mrf.mxu0
    %v169 = vpop.f32.mrf.mxu0
    %v170 = vadd.f32 %v115, %v169
    %v171 = vpop.f32.mrf.mxu0
    %172 = vdwg.mxu0
    %v173 = vpack.c.bf16 %v170, %v167
    %175 = vrot.lane.b32.xlu0 %v173, 96
    %v176 = vpop.permute.xlu0 %175
    %vm177 = vcmask 130048
    %v179 = vsel %vm177, %v173, 0
    %v182 = vsel %vm177, %v176, 0
    %184 = vmatprep.subr.bf16.mxu0 0
    %185 = vmatpush1.bf16.xpose.msra.mxu0 0
    %186 = vmatprep.subr.bf16.mxu0 0
    %187 = vmatpush1.bf16.xpose.msra.mxu0 0
    %188 = vmatprep.subr.bf16.mxu0 0
    %189 = vmatpush1.bf16.xpose.msra.mxu0 0
    %190 = vmatprep.subr.bf16.mxu0 0
    %191 = vmatpush1.bf16.xpose.msra.mxu0 0
    %192 = vmatprep.subr.bf16.mxu0 0
    %193 = vmatpush1.bf16.xpose.msra.mxu0 0
    %194 = vmatprep.subr.bf16.mxu0 0
    %195 = vmatpush1.bf16.xpose.msra.mxu0 0
    %196 = vmatprep.subr.bf16.mxu0 0
    %197 = vmatpush1.bf16.xpose.msra.mxu0 0
    %198 = vmatprep.subr.bf16.mxu0 0
    %199 = vmatpush1.bf16.xpose.msra.mxu0 %v182
    %200 = vmatprep.subr.bf16.mxu0 0
    %201 = vmatpush2.bf16.xpose.msra.mxu0 0
    %202 = vmatprep.subr.bf16.mxu0 0
    %203 = vmatpush2.bf16.xpose.msra.mxu0 0
    %204 = vmatprep.subr.bf16.mxu0 0
    %205 = vmatpush2.bf16.xpose.msra.mxu0 0
    %206 = vmatprep.subr.bf16.mxu0 0
    %207 = vmatpush2.bf16.xpose.msra.mxu0 0
    %208 = vmatprep.subr.bf16.mxu0 0
    %209 = vmatpush2.bf16.xpose.msra.mxu0 0
    %210 = vmatprep.subr.bf16.mxu0 0
    %211 = vmatpush2.bf16.xpose.msra.mxu0 0
    %212 = vmatprep.subr.bf16.mxu0 0
    %213 = vmatpush2.bf16.xpose.msra.mxu0 0
    %214 = vmatprep.subr.bf16.mxu0 0
    %215 = vmatpush2.bf16.xpose.msra.mxu0 0
    %216 = vmatprep.mubr.bf16.mxu0 0
    %217 = vmatmul.mubr.bf16.gmra.mxu0 %v179
    %v218 = vpop.f32.mrf.mxu0
    %v219 = vadd.f32 0.0, %v218
    %v220 = vpop.f32.mrf.mxu0
    %v221 = vpop.f32.mrf.mxu0
    %v222 = vadd.f32 0.0, %v221
    %v223 = vpop.f32.mrf.mxu0
    %224 = vdwg.mxu0
    %v225 = vmul.f32 %v219, 0.25
    %v226 = vmul.f32 %v222, 0.25
    %v227 = vadd.f32 %v225, %v55
    %v228 = vadd.f32 %v226, %v56
    %v229 = vsel %vm177, %v227, -inf
    %230 = vmax.xlane.f32.xlu0 %v229
    %v231 = vpop.xlane.xlu0 %230
    %v232 = vsel %vm177, %v228, -inf
    %233 = vmax.xlane.f32.xlu0 %v232
    %v234 = vpop.xlane.xlu0 %233
    %v235 = vsub.f32 %v227, %v231
    %v236 = vsub.f32 %v228, %v234
    %v237 = vmul.f32 %v235, 1.442695
    %v238 = vpow.pop %v237
    %v239 = vmul.f32 %v236, 1.442695
    %v240 = vpow.pop %v239
    %v241 = vsel %vm177, %v238, 0.0
    %242 = vadd.xlane.f32.xlu0 %v241
    %v243 = vpop.xlane.xlu0 %242
    %v244 = vsel %vm177, %v240, 0.0
    %245 = vadd.xlane.f32.xlu0 %v244
    %v246 = vpop.xlane.xlu0 %245
    %v247 = vrcp.pop %v243
    %v248 = vrcp.pop %v246
    %v249 = vmul.f32 %v238, %v247
    %v250 = vmul.f32 %v240, %v248
    %v251 = vpack.c.bf16 %v250, %v249
    %252 = vrot.lane.b32.xlu0 %v173, 64
    %v253 = vpop.permute.xlu0 %252
    %v256 = vsel %vm177, %v251, 0
    %258 = vmatprep.subr.bf16.mxu0 0
    %259 = vmatpush1.bf16.msra.mxu0 0
    %260 = vmatprep.subr.bf16.mxu0 0
    %261 = vmatpush1.bf16.msra.mxu0 0
    %262 = vmatprep.subr.bf16.mxu0 0
    %263 = vmatpush1.bf16.msra.mxu0 0
    %264 = vmatprep.subr.bf16.mxu0 0
    %265 = vmatpush1.bf16.msra.mxu0 0
    %266 = vmatprep.subr.bf16.mxu0 0
    %267 = vmatpush1.bf16.msra.mxu0 0
    %268 = vmatprep.subr.bf16.mxu0 0
    %269 = vmatpush1.bf16.msra.mxu0 0
    %270 = vmatprep.subr.bf16.mxu0 0
    %271 = vmatpush1.bf16.msra.mxu0 0
    %272 = vmatprep.subr.bf16.mxu0 0
    %273 = vmatpush1.bf16.msra.mxu0 %v253
    %274 = vmatprep.subr.bf16.mxu0 0
    %275 = vmatpush2.bf16.msra.mxu0 0
    %276 = vmatprep.subr.bf16.mxu0 0
    %277 = vmatpush2.bf16.msra.mxu0 0
    %278 = vmatprep.subr.bf16.mxu0 0
    %279 = vmatpush2.bf16.msra.mxu0 0
    %280 = vmatprep.subr.bf16.mxu0 0
    %281 = vmatpush2.bf16.msra.mxu0 0
    %282 = vmatprep.subr.bf16.mxu0 0
    %283 = vmatpush2.bf16.msra.mxu0 0
    %284 = vmatprep.subr.bf16.mxu0 0
    %285 = vmatpush2.bf16.msra.mxu0 0
    %286 = vmatprep.subr.bf16.mxu0 0
    %287 = vmatpush2.bf16.msra.mxu0 0
    %288 = vmatprep.subr.bf16.mxu0 0
    %289 = vmatpush2.bf16.msra.mxu0 0
    %290 = vmatprep.mubr.bf16.mxu0 0
    %291 = vmatmul.mubr.bf16.gmra.mxu0 %v256
    %v292 = vpop.f32.mrf.mxu0
    %v293 = vadd.f32 0.0, %v292
    %v294 = vpop.f32.mrf.mxu0
    %v295 = vpop.f32.mrf.mxu0
    %v296 = vadd.f32 0.0, %v295
    %v297 = vpop.f32.mrf.mxu0
    %298 = vdwg.mxu0
    %299 = vrot.lane.b32.xlu0 %v173, 112
    %v300 = vpop.permute.xlu0 %299
    %301 = vrot.lane.b32.xlu0 %v173, 80
    %v302 = vpop.permute.xlu0 %301
    %v304 = vsel %vm177, %v300, 0
    %v307 = vsel %vm177, %v302, 0
    %309 = vmatprep.subr.bf16.mxu0 0
    %310 = vmatpush1.bf16.xpose.msra.mxu0 0
    %311 = vmatprep.subr.bf16.mxu0 0
    %312 = vmatpush1.bf16.xpose.msra.mxu0 0
    %313 = vmatprep.subr.bf16.mxu0 0
    %314 = vmatpush1.bf16.xpose.msra.mxu0 0
    %315 = vmatprep.subr.bf16.mxu0 0
    %316 = vmatpush1.bf16.xpose.msra.mxu0 0
    %317 = vmatprep.subr.bf16.mxu0 0
    %318 = vmatpush1.bf16.xpose.msra.mxu0 0
    %319 = vmatprep.subr.bf16.mxu0 0
    %320 = vmatpush1.bf16.xpose.msra.mxu0 0
    %321 = vmatprep.subr.bf16.mxu0 0
    %322 = vmatpush1.bf16.xpose.msra.mxu0 0
    %323 = vmatprep.subr.bf16.mxu0 0
    %324 = vmatpush1.bf16.xpose.msra.mxu0 %v307
    %325 = vmatprep.subr.bf16.mxu0 0
    %326 = vmatpush2.bf16.xpose.msra.mxu0 0
    %327 = vmatprep.subr.bf16.mxu0 0
    %328 = vmatpush2.bf16.xpose.msra.mxu0 0
    %329 = vmatprep.subr.bf16.mxu0 0
    %330 = vmatpush2.bf16.xpose.msra.mxu0 0
    %331 = vmatprep.subr.bf16.mxu0 0
    %332 = vmatpush2.bf16.xpose.msra.mxu0 0
    %333 = vmatprep.subr.bf16.mxu0 0
    %334 = vmatpush2.bf16.xpose.msra.mxu0 0
    %335 = vmatprep.subr.bf16.mxu0 0
    %336 = vmatpush2.bf16.xpose.msra.mxu0 0
    %337 = vmatprep.subr.bf16.mxu0 0
    %338 = vmatpush2.bf16.xpose.msra.mxu0 0
    %339 = vmatprep.subr.bf16.mxu0 0
    %340 = vmatpush2.bf16.xpose.msra.mxu0 0
    %341 = vmatprep.mubr.bf16.mxu0 0
    %342 = vmatmul.mubr.bf16.gmra.mxu0 %v304
    %v343 = vpop.f32.mrf.mxu0
    %v344 = vadd.f32 0.0, %v343
    %v345 = vpop.f32.mrf.mxu0
    %v346 = vpop.f32.mrf.mxu0
    %v347 = vadd.f32 0.0, %v346
    %v348 = vpop.f32.mrf.mxu0
    %349 = vdwg.mxu0
    %v350 = vmul.f32 %v344, 0.25
    %v351 = vmul.f32 %v347, 0.25
    %v352 = vadd.f32 %v350, %v55
    %v353 = vadd.f32 %v351, %v56
    %v354 = vsel %vm177, %v352, -inf
    %355 = vmax.xlane.f32.xlu0 %v354
    %v356 = vpop.xlane.xlu0 %355
    %v357 = vsel %vm177, %v353, -inf
    %358 = vmax.xlane.f32.xlu0 %v357
    %v359 = vpop.xlane.xlu0 %358
    %v360 = vsub.f32 %v352, %v356
    %v361 = vsub.f32 %v353, %v359
    %v362 = vmul.f32 %v360, 1.442695
    %v363 = vpow.pop %v362
    %v364 = vmul.f32 %v361, 1.442695
    %v365 = vpow.pop %v364
    %v366 = vsel %vm177, %v363, 0.0
    %367 = vadd.xlane.f32.xlu0 %v366
    %v368 = vpop.xlane.xlu0 %367
    %v369 = vsel %vm177, %v365, 0.0
    %370 = vadd.xlane.f32.xlu0 %v369
    %v371 = vpop.xlane.xlu0 %370
    %v372 = vrcp.pop %v368
    %v373 = vrcp.pop %v371
    %v374 = vmul.f32 %v363, %v372
    %v375 = vmul.f32 %v365, %v373
    %v376 = vpack.c.bf16 %v375, %v374
    %377 = vrot.lane.b32.xlu0 %v173, 48
    %v378 = vpop.permute.xlu0 %377
    %v381 = vsel %vm177, %v376, 0
    %383 = vmatprep.subr.bf16.mxu0 0
    %384 = vmatpush1.bf16.msra.mxu0 0
    %385 = vmatprep.subr.bf16.mxu0 0
    %386 = vmatpush1.bf16.msra.mxu0 0
    %387 = vmatprep.subr.bf16.mxu0 0
    %388 = vmatpush1.bf16.msra.mxu0 0
    %389 = vmatprep.subr.bf16.mxu0 0
    %390 = vmatpush1.bf16.msra.mxu0 0
    %391 = vmatprep.subr.bf16.mxu0 0
    %392 = vmatpush1.bf16.msra.mxu0 0
    %393 = vmatprep.subr.bf16.mxu0 0
    %394 = vmatpush1.bf16.msra.mxu0 0
    %395 = vmatprep.subr.bf16.mxu0 0
    %396 = vmatpush1.bf16.msra.mxu0 0
    %397 = vmatprep.subr.bf16.mxu0 0
    %398 = vmatpush1.bf16.msra.mxu0 %v378
    %399 = vmatprep.subr.bf16.mxu0 0
    %400 = vmatpush2.bf16.msra.mxu0 0
    %401 = vmatprep.subr.bf16.mxu0 0
    %402 = vmatpush2.bf16.msra.mxu0 0
    %403 = vmatprep.subr.bf16.mxu0 0
    %404 = vmatpush2.bf16.msra.mxu0 0
    %405 = vmatprep.subr.bf16.mxu0 0
    %406 = vmatpush2.bf16.msra.mxu0 0
    %407 = vmatprep.subr.bf16.mxu0 0
    %408 = vmatpush2.bf16.msra.mxu0 0
    %409 = vmatprep.subr.bf16.mxu0 0
    %410 = vmatpush2.bf16.msra.mxu0 0
    %411 = vmatprep.subr.bf16.mxu0 0
    %412 = vmatpush2.bf16.msra.mxu0 0
    %413 = vmatprep.subr.bf16.mxu0 0
    %414 = vmatpush2.bf16.msra.mxu0 0
    %415 = vmatprep.mubr.bf16.mxu0 0
    %416 = vmatmul.mubr.bf16.gmra.mxu0 %v381
    %v417 = vpop.f32.mrf.mxu0
    %v418 = vadd.f32 0.0, %v417
    %v419 = vpop.f32.mrf.mxu0
    %v420 = vpop.f32.mrf.mxu0
    %v421 = vadd.f32 0.0, %v420
    %v422 = vpop.f32.mrf.mxu0
    %423 = vdwg.mxu0
    %426 = vrot.lane.b32.xlu0 %v418, 16
    %v427 = vpop.permute.xlu0 %426
    %428 = vrot.lane.b32.xlu0 %v421, 16
    %v429 = vpop.permute.xlu0 %428
    %v432 = vsel %vm177, %v293, %v427
    %v433 = vsel %vm177, %v296, %v429
    %v434 = vpack.c.bf16 %v433, %v432
    %v435 = vld [vmem:[%s6] sm:$0xf]
    %v436 = vld [vmem:[%s6 + $0x4] sm:$0xf]
    %v437 = vld [vmem:[%s6 + $0x8] sm:$0xf]
    %v438 = vld [vmem:[%s6 + $0xc] sm:$0xf]
    %v439 = vld [vmem:[%s7] sm:$0x1]
    %v441 = vlaneseq
    %v442 = vshrl.u32 %v441, 7
    %v443 = vsub.s32 0, %v442
    %v444 = vrot.slane %v439, %v443
    %v450 = vunpack.c.l.b16 %v435
    %v451 = vunpack.c.l.b16 %v436
    %v452 = vunpack.c.l.b16 %v437
    %v453 = vunpack.c.l.b16 %v438
    %v454 = vpack.c.b16 %v451, %v450
    %v455 = vpack.c.b16 %v453, %v452
    %v459 = vsel %vm61, %v434, 0
    %461 = vmatprep.subr.bf16.mxu0 0
    %462 = vmatpush1.bf16.msra.mxu0 0
    %463 = vmatprep.subr.bf16.mxu0 0
    %464 = vmatpush1.bf16.msra.mxu0 0
    %465 = vmatprep.subr.bf16.mxu0 0
    %466 = vmatpush1.bf16.msra.mxu0 0
    %467 = vmatprep.subr.bf16.mxu0 0
    %468 = vmatpush1.bf16.msra.mxu0 0
    %469 = vmatprep.subr.bf16.mxu0 0
    %470 = vmatpush1.bf16.msra.mxu0 0
    %471 = vmatprep.subr.bf16.mxu0 0
    %472 = vmatpush1.bf16.msra.mxu0 0
    %473 = vmatprep.subr.bf16.mxu0 0
    %474 = vmatpush1.bf16.msra.mxu0 %v455
    %475 = vmatprep.subr.bf16.mxu0 0
    %476 = vmatpush1.bf16.msra.mxu0 %v454
    %477 = vmatprep.subr.bf16.mxu0 0
    %478 = vmatpush2.bf16.msra.mxu0 0
    %479 = vmatprep.subr.bf16.mxu0 0
    %480 = vmatpush2.bf16.msra.mxu0 0
    %481 = vmatprep.subr.bf16.mxu0 0
    %482 = vmatpush2.bf16.msra.mxu0 0
    %483 = vmatprep.subr.bf16.mxu0 0
    %484 = vmatpush2.bf16.msra.mxu0 0
    %485 = vmatprep.subr.bf16.mxu0 0
    %486 = vmatpush2.bf16.msra.mxu0 0
    %487 = vmatprep.subr.bf16.mxu0 0
    %488 = vmatpush2.bf16.msra.mxu0 0
    %489 = vmatprep.subr.bf16.mxu0 0
    %490 = vmatpush2.bf16.msra.mxu0 0
    %491 = vmatprep.subr.bf16.mxu0 0
    %492 = vmatpush2.bf16.msra.mxu0 0
    %493 = vmatprep.mubr.bf16.mxu0 0
    %494 = vmatmul.mubr.bf16.gmra.mxu0 %v459
    %v495 = vpop.f32.mrf.mxu0
    %v496 = vadd.f32 %v444, %v495
    %v497 = vpop.f32.mrf.mxu0
    %v498 = vpop.f32.mrf.mxu0
    %v499 = vadd.f32 %v444, %v498
    %v500 = vpop.f32.mrf.mxu0
    %501 = vdwg.mxu0
    %v502 = vadd.f32 %v496, %v103
    %v503 = vadd.f32 %v499, %v104
    %v504 = vld [vmem:[%s8] sm:$0x1]
    %v505 = vld [vmem:[%s9] sm:$0x1]
    %v506 = vsel %vm61, %v502, 0.0
    %507 = vadd.xlane.f32.xlu0 %v506
    %v508 = vpop.xlane.xlu0 %507
    %v509 = vsel %vm61, %v503, 0.0
    %510 = vadd.xlane.f32.xlu0 %v509
    %v511 = vpop.xlane.xlu0 %510
    %v512 = vmul.f32 %v508, %v68
    %v513 = vmul.f32 %v511, %v68
    %v514 = vsub.f32 %v502, %v512
    %v515 = vsub.f32 %v503, %v513
    %v516 = vmul.f32 %v514, %v514
    %v517 = vmul.f32 %v515, %v515
    %v518 = vsel %vm61, %v516, 0.0
    %519 = vadd.xlane.f32.xlu0 %v518
    %v520 = vpop.xlane.xlu0 %519
    %v521 = vsel %vm61, %v517, 0.0
    %522 = vadd.xlane.f32.xlu0 %v521
    %v523 = vpop.xlane.xlu0 %522
    %v524 = vmul.f32 %v520, %v68
    %v525 = vmul.f32 %v523, %v68
    %v526 = vadd.f32 %v524, 1e-12
    %v527 = vadd.f32 %v525, 1e-12
    %v528 = vrsqrt.pop %v526
    %v529 = vrsqrt.pop %v527
    %v530 = vmul.f32 %v514, %v528
    %v531 = vmul.f32 %v515, %v529
    %v533 = vlaneseq
    %v534 = vshrl.u32 %v533, 7
    %v535 = vsub.s32 0, %v534
    %v536 = vrot.slane %v504, %v535
    %v538 = vmul.f32 %v530, %v536
    %v539 = vmul.f32 %v531, %v536
    %v541 = vlaneseq
    %v542 = vshrl.u32 %v541, 7
    %v543 = vsub.s32 0, %v542
    %v544 = vrot.slane %v505, %v543
    %v546 = vadd.f32 %v538, %v544
    %v547 = vadd.f32 %v539, %v544
    %v548 = vpack.c.bf16 %v547, %v546
    %v549 = vld [vmem:[%s10] sm:$0xf]
    %v550 = vld [vmem:[%s10 + $0x4] sm:$0xf]
    %v551 = vld [vmem:[%s10 + $0x8] sm:$0xf]
    %v552 = vld [vmem:[%s10 + $0xc] sm:$0xf]
    %v553 = vld [vmem:[%s11] sm:$0x1]
    %v555 = vlaneseq
    %v556 = vshrl.u32 %v555, 7
    %v557 = vsub.s32 0, %v556
    %v558 = vrot.slane %v553, %v557
    %v564 = vunpack.c.l.b16 %v549
    %v565 = vunpack.c.l.b16 %v550
    %v566 = vunpack.c.l.b16 %v551
    %v567 = vunpack.c.l.b16 %v552
    %v568 = vpack.c.b16 %v565, %v564
    %v569 = vpack.c.b16 %v567, %v566
    %v573 = vsel %vm61, %v548, 0
    %575 = vmatprep.subr.bf16.mxu0 0
    %576 = vmatpush1.bf16.msra.mxu0 0
    %577 = vmatprep.subr.bf16.mxu0 0
    %578 = vmatpush1.bf16.msra.mxu0 0
    %579 = vmatprep.subr.bf16.mxu0 0
    %580 = vmatpush1.bf16.msra.mxu0 0
    %581 = vmatprep.subr.bf16.mxu0 0
    %582 = vmatpush1.bf16.msra.mxu0 0
    %583 = vmatprep.subr.bf16.mxu0 0
    %584 = vmatpush1.bf16.msra.mxu0 0
    %585 = vmatprep.subr.bf16.mxu0 0
    %586 = vmatpush1.bf16.msra.mxu0 0
    %587 = vmatprep.subr.bf16.mxu0 0
    %588 = vmatpush1.bf16.msra.mxu0 %v569
    %589 = vmatprep.subr.bf16.mxu0 0
    %590 = vmatpush1.bf16.msra.mxu0 %v568
    %591 = vmatprep.subr.bf16.mxu0 0
    %592 = vmatpush2.bf16.msra.mxu0 0
    %593 = vmatprep.subr.bf16.mxu0 0
    %594 = vmatpush2.bf16.msra.mxu0 0
    %595 = vmatprep.subr.bf16.mxu0 0
    %596 = vmatpush2.bf16.msra.mxu0 0
    %597 = vmatprep.subr.bf16.mxu0 0
    %598 = vmatpush2.bf16.msra.mxu0 0
    %599 = vmatprep.subr.bf16.mxu0 0
    %600 = vmatpush2.bf16.msra.mxu0 0
    %601 = vmatprep.subr.bf16.mxu0 0
    %602 = vmatpush2.bf16.msra.mxu0 0
    %603 = vmatprep.subr.bf16.mxu0 0
    %604 = vmatpush2.bf16.msra.mxu0 0
    %605 = vmatprep.subr.bf16.mxu0 0
    %606 = vmatpush2.bf16.msra.mxu0 0
    %607 = vmatprep.mubr.bf16.mxu0 0
    %608 = vmatmul.mubr.bf16.gmra.mxu0 %v573
    %v609 = vpop.f32.mrf.mxu0
    %v610 = vadd.f32 %v558, %v609
    %v611 = vpop.f32.mrf.mxu0
    %v612 = vpop.f32.mrf.mxu0
    %v613 = vadd.f32 %v558, %v612
    %v614 = vpop.f32.mrf.mxu0
    %615 = vdwg.mxu0
    %v616 = vmul.f32 %v610, 0.5
    %v617 = vmul.f32 %v613, 0.5
    %v618 = vmul.f32 %v610, 0.70710677
    %v619 = vmul.f32 %v613, 0.70710677
    %v620 = vand.u32 2147483647, %v618
    %v621 = vand.u32 2147483647, %v619
    %v622 = vmul.f32 %v620, 0.3275911
    %v623 = vmul.f32 %v621, 0.3275911
    %v624 = vadd.f32 %v622, 1.0
    %v625 = vadd.f32 %v623, 1.0
    %v626 = vrcp.pop %v624
    %v627 = vmul.f32 1.0, %v626
    %v628 = vrcp.pop %v625
    %v629 = vmul.f32 1.0, %v628
    %v630 = vmul.f32 %v627, 1.0614054
    %v631 = vmul.f32 %v629, 1.0614054
    %v632 = vadd.f32 %v630, -1.4531521
    %v633 = vadd.f32 %v631, -1.4531521
    %v634 = vmul.f32 %v632, %v627
    %v635 = vmul.f32 %v633, %v629
    %v636 = vadd.f32 %v634, 1.4214138
    %v637 = vadd.f32 %v635, 1.4214138
    %v638 = vmul.f32 %v636, %v627
    %v639 = vmul.f32 %v637, %v629
    %v640 = vadd.f32 %v638, -0.28449672
    %v641 = vadd.f32 %v639, -0.28449672
    %v642 = vmul.f32 %v640, %v627
    %v643 = vmul.f32 %v641, %v629
    %v644 = vadd.f32 %v642, 0.2548296
    %v645 = vadd.f32 %v643, 0.2548296
    %v646 = vmul.f32 %v644, %v627
    %v647 = vmul.f32 %v645, %v629
    %v648 = vsub.f32 0.0, %v620
    %v649 = vsub.f32 0.0, %v621
    %v650 = vmul.f32 %v648, %v620
    %v651 = vmul.f32 %v649, %v621
    %v652 = vmul.f32 %v650, 1.442695
    %v653 = vpow.pop %v652
    %v654 = vmul.f32 %v651, 1.442695
    %v655 = vpow.pop %v654
    %v656 = vmul.f32 %v646, %v653
    %v657 = vmul.f32 %v647, %v655
    %v658 = vsub.f32 1.0, %v656
    %v659 = vsub.f32 1.0, %v657
    %vm660 = vcmp.ge.f32.partialorder %v618, 0.0
    %vm661 = vcmp.ge.f32.partialorder %v619, 0.0
    %v662 = vsub.f32 0.0, %v658
    %v663 = vsub.f32 0.0, %v659
    %v664 = vsel %vm660, %v658, %v662
    %v665 = vsel %vm661, %v659, %v663
    %v666 = vadd.f32 %v664, 1.0
    %v667 = vadd.f32 %v665, 1.0
    %v668 = vmul.f32 %v616, %v666
    %v669 = vmul.f32 %v617, %v667
    %v670 = vpack.c.bf16 %v669, %v668
    %v671 = vld [vmem:[%s12] sm:$0xf]
    %v672 = vld [vmem:[%s12 + $0x4] sm:$0xf]
    %v673 = vld [vmem:[%s12 + $0x8] sm:$0xf]
    %v674 = vld [vmem:[%s12 + $0xc] sm:$0xf]
    %v675 = vld [vmem:[%s12 + $0x10] sm:$0xf]
    %v676 = vld [vmem:[%s12 + $0x14] sm:$0xf]
    %v677 = vld [vmem:[%s12 + $0x18] sm:$0xf]
    %v678 = vld [vmem:[%s12 + $0x1c] sm:$0xf]
    %v679 = vld [vmem:[%s13] sm:$0x1]
    %v681 = vlaneseq
    %v682 = vshrl.u32 %v681, 7
    %v683 = vsub.s32 0, %v682
    %v684 = vrot.slane %v679, %v683
    %v694 = vunpack.c.l.b16 %v671
    %v695 = vunpack.c.l.b16 %v672
    %v696 = vunpack.c.l.b16 %v673
    %v697 = vunpack.c.l.b16 %v674
    %v698 = vunpack.c.l.b16 %v675
    %v699 = vunpack.c.l.b16 %v676
    %v700 = vunpack.c.l.b16 %v677
    %v701 = vunpack.c.l.b16 %v678
    %v702 = vpack.c.b16 %v695, %v694
    %v703 = vpack.c.b16 %v697, %v696
    %v704 = vpack.c.b16 %v699, %v698
    %v705 = vpack.c.b16 %v701, %v700
    %vm710 = vcmask 523264
    %v712 = vsel %vm710, %v670, 0
    %714 = vmatprep.subr.bf16.mxu0 0
    %715 = vmatpush1.bf16.msra.mxu0 0
    %716 = vmatprep.subr.bf16.mxu0 0
    %717 = vmatpush1.bf16.msra.mxu0 0
    %718 = vmatprep.subr.bf16.mxu0 0
    %719 = vmatpush1.bf16.msra.mxu0 0
    %720 = vmatprep.subr.bf16.mxu0 0
    %721 = vmatpush1.bf16.msra.mxu0 0
    %722 = vmatprep.subr.bf16.mxu0 0
    %723 = vmatpush1.bf16.msra.mxu0 %v705
    %724 = vmatprep.subr.bf16.mxu0 0
    %725 = vmatpush1.bf16.msra.mxu0 %v704
    %726 = vmatprep.subr.bf16.mxu0 0
    %727 = vmatpush1.bf16.msra.mxu0 %v703
    %728 = vmatprep.subr.bf16.mxu0 0
    %729 = vmatpush1.bf16.msra.mxu0 %v702
    %730 = vmatprep.subr.bf16.mxu0 0
    %731 = vmatpush2.bf16.msra.mxu0 0
    %732 = vmatprep.subr.bf16.mxu0 0
    %733 = vmatpush2.bf16.msra.mxu0 0
    %734 = vmatprep.subr.bf16.mxu0 0
    %735 = vmatpush2.bf16.msra.mxu0 0
    %736 = vmatprep.subr.bf16.mxu0 0
    %737 = vmatpush2.bf16.msra.mxu0 0
    %738 = vmatprep.subr.bf16.mxu0 0
    %739 = vmatpush2.bf16.msra.mxu0 0
    %740 = vmatprep.subr.bf16.mxu0 0
    %741 = vmatpush2.bf16.msra.mxu0 0
    %742 = vmatprep.subr.bf16.mxu0 0
    %743 = vmatpush2.bf16.msra.mxu0 0
    %744 = vmatprep.subr.bf16.mxu0 0
    %745 = vmatpush2.bf16.msra.mxu0 0
    %746 = vmatprep.mubr.bf16.mxu0 0
    %747 = vmatmul.mubr.bf16.gmra.mxu0 %v712
    %v748 = vpop.f32.mrf.mxu0
    %v749 = vadd.f32 %v684, %v748
    %v750 = vpop.f32.mrf.mxu0
    %v751 = vpop.f32.mrf.mxu0
    %v752 = vadd.f32 %v684, %v751
    %v753 = vpop.f32.mrf.mxu0
    %754 = vdwg.mxu0
    %v755 = vadd.f32 %v749, %v546
    %v756 = vadd.f32 %v752, %v547
    %v757 = vld [vmem:[%s14] sm:$0x1]
    %v758 = vld [vmem:[%s15] sm:$0x1]
    %v759 = vsel %vm61, %v755, 0.0
    %760 = vadd.xlane.f32.xlu0 %v759
    %v761 = vpop.xlane.xlu0 %760
    %v762 = vsel %vm61, %v756, 0.0
    %763 = vadd.xlane.f32.xlu0 %v762
    %v764 = vpop.xlane.xlu0 %763
    %v765 = vmul.f32 %v761, %v68
    %v766 = vmul.f32 %v764, %v68
    %v767 = vsub.f32 %v755, %v765
    %v768 = vsub.f32 %v756, %v766
    %v769 = vmul.f32 %v767, %v767
    %v770 = vmul.f32 %v768, %v768
    %v771 = vsel %vm61, %v769, 0.0
    %772 = vadd.xlane.f32.xlu0 %v771
    %v773 = vpop.xlane.xlu0 %772
    %v774 = vsel %vm61, %v770, 0.0
    %775 = vadd.xlane.f32.xlu0 %v774
    %v776 = vpop.xlane.xlu0 %775
    %v777 = vmul.f32 %v773, %v68
    %v778 = vmul.f32 %v776, %v68
    %v779 = vadd.f32 %v777, 1e-12
    %v780 = vadd.f32 %v778, 1e-12
    %v781 = vrsqrt.pop %v779
    %v782 = vrsqrt.pop %v780
    %v783 = vmul.f32 %v767, %v781
    %v784 = vmul.f32 %v768, %v782
    %v786 = vlaneseq
    %v787 = vshrl.u32 %v786, 7
    %v788 = vsub.s32 0, %v787
    %v789 = vrot.slane %v757, %v788
    %v791 = vmul.f32 %v783, %v789
    %v792 = vmul.f32 %v784, %v789
    %v794 = vlaneseq
    %v795 = vshrl.u32 %v794, 7
    %v796 = vsub.s32 0, %v795
    %v797 = vrot.slane %v758, %v796
    %v799 = vadd.f32 %v791, %v797
    %v800 = vadd.f32 %v792, %v797
    %v801 = vpack.c.bf16 %v800, %v799
    %s802 = scalar_lea.vmem %s4, 16
    %v803 = vld [vmem:[%s802] sm:$0xf]
    %v804 = vld [vmem:[%s802 + $0x4] sm:$0xf]
    %v805 = vld [vmem:[%s802 + $0x8] sm:$0xf]
    %v806 = vld [vmem:[%s802 + $0xc] sm:$0xf]
    %s807 = scalar_lea.vmem %s5, 1
    %v808 = vld [vmem:[%s807] sm:$0x1]
    %v810 = vlaneseq
    %v811 = vshrl.u32 %v810, 7
    %v812 = vsub.s32 0, %v811
    %v813 = vrot.slane %v808, %v812
    %v819 = vunpack.c.l.b16 %v803
    %v820 = vunpack.c.l.b16 %v804
    %v821 = vunpack.c.l.b16 %v805
    %v822 = vunpack.c.l.b16 %v806
    %v823 = vpack.c.b16 %v820, %v819
    %v824 = vpack.c.b16 %v822, %v821
    %v828 = vsel %vm61, %v801, 0
    %830 = vmatprep.subr.bf16.mxu0 0
    %831 = vmatpush1.bf16.msra.mxu0 0
    %832 = vmatprep.subr.bf16.mxu0 0
    %833 = vmatpush1.bf16.msra.mxu0 0
    %834 = vmatprep.subr.bf16.mxu0 0
    %835 = vmatpush1.bf16.msra.mxu0 0
    %836 = vmatprep.subr.bf16.mxu0 0
    %837 = vmatpush1.bf16.msra.mxu0 0
    %838 = vmatprep.subr.bf16.mxu0 0
    %839 = vmatpush1.bf16.msra.mxu0 0
    %840 = vmatprep.subr.bf16.mxu0 0
    %841 = vmatpush1.bf16.msra.mxu0 0
    %842 = vmatprep.subr.bf16.mxu0 0
    %843 = vmatpush1.bf16.msra.mxu0 %v824
    %844 = vmatprep.subr.bf16.mxu0 0
    %845 = vmatpush1.bf16.msra.mxu0 %v823
    %846 = vmatprep.subr.bf16.mxu0 0
    %847 = vmatpush2.bf16.msra.mxu0 0
    %848 = vmatprep.subr.bf16.mxu0 0
    %849 = vmatpush2.bf16.msra.mxu0 0
    %850 = vmatprep.subr.bf16.mxu0 0
    %851 = vmatpush2.bf16.msra.mxu0 0
    %852 = vmatprep.subr.bf16.mxu0 0
    %853 = vmatpush2.bf16.msra.mxu0 0
    %854 = vmatprep.subr.bf16.mxu0 0
    %855 = vmatpush2.bf16.msra.mxu0 0
    %856 = vmatprep.subr.bf16.mxu0 0
    %857 = vmatpush2.bf16.msra.mxu0 0
    %858 = vmatprep.subr.bf16.mxu0 0
    %859 = vmatpush2.bf16.msra.mxu0 0
    %860 = vmatprep.subr.bf16.mxu0 0
    %861 = vmatpush2.bf16.msra.mxu0 0
    %862 = vmatprep.mubr.bf16.mxu0 0
    %863 = vmatmul.mubr.bf16.gmra.mxu0 %v828
    %v864 = vpop.f32.mrf.mxu0
    %v865 = vadd.f32 %v813, %v864
    %v866 = vpop.f32.mrf.mxu0
    %v867 = vpop.f32.mrf.mxu0
    %v868 = vadd.f32 %v813, %v867
    %v869 = vpop.f32.mrf.mxu0
    %870 = vdwg.mxu0
    %v871 = vpack.c.bf16 %v868, %v865
    %873 = vrot.lane.b32.xlu0 %v871, 96
    %v874 = vpop.permute.xlu0 %873
    %v876 = vsel %vm177, %v871, 0
    %v879 = vsel %vm177, %v874, 0
    %881 = vmatprep.subr.bf16.mxu0 0
    %882 = vmatpush1.bf16.xpose.msra.mxu0 0
    %883 = vmatprep.subr.bf16.mxu0 0
    %884 = vmatpush1.bf16.xpose.msra.mxu0 0
    %885 = vmatprep.subr.bf16.mxu0 0
    %886 = vmatpush1.bf16.xpose.msra.mxu0 0
    %887 = vmatprep.subr.bf16.mxu0 0
    %888 = vmatpush1.bf16.xpose.msra.mxu0 0
    %889 = vmatprep.subr.bf16.mxu0 0
    %890 = vmatpush1.bf16.xpose.msra.mxu0 0
    %891 = vmatprep.subr.bf16.mxu0 0
    %892 = vmatpush1.bf16.xpose.msra.mxu0 0
    %893 = vmatprep.subr.bf16.mxu0 0
    %894 = vmatpush1.bf16.xpose.msra.mxu0 0
    %895 = vmatprep.subr.bf16.mxu0 0
    %896 = vmatpush1.bf16.xpose.msra.mxu0 %v879
    %897 = vmatprep.subr.bf16.mxu0 0
    %898 = vmatpush2.bf16.xpose.msra.mxu0 0
    %899 = vmatprep.subr.bf16.mxu0 0
    %900 = vmatpush2.bf16.xpose.msra.mxu0 0
    %901 = vmatprep.subr.bf16.mxu0 0
    %902 = vmatpush2.bf16.xpose.msra.mxu0 0
    %903 = vmatprep.subr.bf16.mxu0 0
    %904 = vmatpush2.bf16.xpose.msra.mxu0 0
    %905 = vmatprep.subr.bf16.mxu0 0
    %906 = vmatpush2.bf16.xpose.msra.mxu0 0
    %907 = vmatprep.subr.bf16.mxu0 0
    %908 = vmatpush2.bf16.xpose.msra.mxu0 0
    %909 = vmatprep.subr.bf16.mxu0 0
    %910 = vmatpush2.bf16.xpose.msra.mxu0 0
    %911 = vmatprep.subr.bf16.mxu0 0
    %912 = vmatpush2.bf16.xpose.msra.mxu0 0
    %913 = vmatprep.mubr.bf16.mxu0 0
    %914 = vmatmul.mubr.bf16.gmra.mxu0 %v876
    %v915 = vpop.f32.mrf.mxu0
    %v916 = vadd.f32 0.0, %v915
    %v917 = vpop.f32.mrf.mxu0
    %v918 = vpop.f32.mrf.mxu0
    %v919 = vadd.f32 0.0, %v918
    %v920 = vpop.f32.mrf.mxu0
    %921 = vdwg.mxu0
    %v922 = vmul.f32 %v916, 0.25
    %v923 = vmul.f32 %v919, 0.25
    %v924 = vadd.f32 %v922, %v55
    %v925 = vadd.f32 %v923, %v56
    %v926 = vsel %vm177, %v924, -inf
    %927 = vmax.xlane.f32.xlu0 %v926
    %v928 = vpop.xlane.xlu0 %927
    %v929 = vsel %vm177, %v925, -inf
    %930 = vmax.xlane.f32.xlu0 %v929
    %v931 = vpop.xlane.xlu0 %930
    %v932 = vsub.f32 %v924, %v928
    %v933 = vsub.f32 %v925, %v931
    %v934 = vmul.f32 %v932, 1.442695
    %v935 = vpow.pop %v934
    %v936 = vmul.f32 %v933, 1.442695
    %v937 = vpow.pop %v936
    %v938 = vsel %vm177, %v935, 0.0
    %939 = vadd.xlane.f32.xlu0 %v938
    %v940 = vpop.xlane.xlu0 %939
    %v941 = vsel %vm177, %v937, 0.0
    %942 = vadd.xlane.f32.xlu0 %v941
    %v943 = vpop.xlane.xlu0 %942
    %v944 = vrcp.pop %v940
    %v945 = vrcp.pop %v943
    %v946 = vmul.f32 %v935, %v944
    %v947 = vmul.f32 %v937, %v945
    %v948 = vpack.c.bf16 %v947, %v946
    %949 = vrot.lane.b32.xlu0 %v871, 64
    %v950 = vpop.permute.xlu0 %949
    %v953 = vsel %vm177, %v948, 0
    %955 = vmatprep.subr.bf16.mxu0 0
    %956 = vmatpush1.bf16.msra.mxu0 0
    %957 = vmatprep.subr.bf16.mxu0 0
    %958 = vmatpush1.bf16.msra.mxu0 0
    %959 = vmatprep.subr.bf16.mxu0 0
    %960 = vmatpush1.bf16.msra.mxu0 0
    %961 = vmatprep.subr.bf16.mxu0 0
    %962 = vmatpush1.bf16.msra.mxu0 0
    %963 = vmatprep.subr.bf16.mxu0 0
    %964 = vmatpush1.bf16.msra.mxu0 0
    %965 = vmatprep.subr.bf16.mxu0 0
    %966 = vmatpush1.bf16.msra.mxu0 0
    %967 = vmatprep.subr.bf16.mxu0 0
    %968 = vmatpush1.bf16.msra.mxu0 0
    %969 = vmatprep.subr.bf16.mxu0 0
    %970 = vmatpush1.bf16.msra.mxu0 %v950
    %971 = vmatprep.subr.bf16.mxu0 0
    %972 = vmatpush2.bf16.msra.mxu0 0
    %973 = vmatprep.subr.bf16.mxu0 0
    %974 = vmatpush2.bf16.msra.mxu0 0
    %975 = vmatprep.subr.bf16.mxu0 0
    %976 = vmatpush2.bf16.msra.mxu0 0
    %977 = vmatprep.subr.bf16.mxu0 0
    %978 = vmatpush2.bf16.msra.mxu0 0
    %979 = vmatprep.subr.bf16.mxu0 0
    %980 = vmatpush2.bf16.msra.mxu0 0
    %981 = vmatprep.subr.bf16.mxu0 0
    %982 = vmatpush2.bf16.msra.mxu0 0
    %983 = vmatprep.subr.bf16.mxu0 0
    %984 = vmatpush2.bf16.msra.mxu0 0
    %985 = vmatprep.subr.bf16.mxu0 0
    %986 = vmatpush2.bf16.msra.mxu0 0
    %987 = vmatprep.mubr.bf16.mxu0 0
    %988 = vmatmul.mubr.bf16.gmra.mxu0 %v953
    %v989 = vpop.f32.mrf.mxu0
    %v990 = vadd.f32 0.0, %v989
    %v991 = vpop.f32.mrf.mxu0
    %v992 = vpop.f32.mrf.mxu0
    %v993 = vadd.f32 0.0, %v992
    %v994 = vpop.f32.mrf.mxu0
    %995 = vdwg.mxu0
    %996 = vrot.lane.b32.xlu0 %v871, 112
    %v997 = vpop.permute.xlu0 %996
    %998 = vrot.lane.b32.xlu0 %v871, 80
    %v999 = vpop.permute.xlu0 %998
    %v1001 = vsel %vm177, %v997, 0
    %v1004 = vsel %vm177, %v999, 0
    %1006 = vmatprep.subr.bf16.mxu0 0
    %1007 = vmatpush1.bf16.xpose.msra.mxu0 0
    %1008 = vmatprep.subr.bf16.mxu0 0
    %1009 = vmatpush1.bf16.xpose.msra.mxu0 0
    %1010 = vmatprep.subr.bf16.mxu0 0
    %1011 = vmatpush1.bf16.xpose.msra.mxu0 0
    %1012 = vmatprep.subr.bf16.mxu0 0
    %1013 = vmatpush1.bf16.xpose.msra.mxu0 0
    %1014 = vmatprep.subr.bf16.mxu0 0
    %1015 = vmatpush1.bf16.xpose.msra.mxu0 0
    %1016 = vmatprep.subr.bf16.mxu0 0
    %1017 = vmatpush1.bf16.xpose.msra.mxu0 0
    %1018 = vmatprep.subr.bf16.mxu0 0
    %1019 = vmatpush1.bf16.xpose.msra.mxu0 0
    %1020 = vmatprep.subr.bf16.mxu0 0
    %1021 = vmatpush1.bf16.xpose.msra.mxu0 %v1004
    %1022 = vmatprep.subr.bf16.mxu0 0
    %1023 = vmatpush2.bf16.xpose.msra.mxu0 0
    %1024 = vmatprep.subr.bf16.mxu0 0
    %1025 = vmatpush2.bf16.xpose.msra.mxu0 0
    %1026 = vmatprep.subr.bf16.mxu0 0
    %1027 = vmatpush2.bf16.xpose.msra.mxu0 0
    %1028 = vmatprep.subr.bf16.mxu0 0
    %1029 = vmatpush2.bf16.xpose.msra.mxu0 0
    %1030 = vmatprep.subr.bf16.mxu0 0
    %1031 = vmatpush2.bf16.xpose.msra.mxu0 0
    %1032 = vmatprep.subr.bf16.mxu0 0
    %1033 = vmatpush2.bf16.xpose.msra.mxu0 0
    %1034 = vmatprep.subr.bf16.mxu0 0
    %1035 = vmatpush2.bf16.xpose.msra.mxu0 0
    %1036 = vmatprep.subr.bf16.mxu0 0
    %1037 = vmatpush2.bf16.xpose.msra.mxu0 0
    %1038 = vmatprep.mubr.bf16.mxu0 0
    %1039 = vmatmul.mubr.bf16.gmra.mxu0 %v1001
    %v1040 = vpop.f32.mrf.mxu0
    %v1041 = vadd.f32 0.0, %v1040
    %v1042 = vpop.f32.mrf.mxu0
    %v1043 = vpop.f32.mrf.mxu0
    %v1044 = vadd.f32 0.0, %v1043
    %v1045 = vpop.f32.mrf.mxu0
    %1046 = vdwg.mxu0
    %v1047 = vmul.f32 %v1041, 0.25
    %v1048 = vmul.f32 %v1044, 0.25
    %v1049 = vadd.f32 %v1047, %v55
    %v1050 = vadd.f32 %v1048, %v56
    %v1051 = vsel %vm177, %v1049, -inf
    %1052 = vmax.xlane.f32.xlu0 %v1051
    %v1053 = vpop.xlane.xlu0 %1052
    %v1054 = vsel %vm177, %v1050, -inf
    %1055 = vmax.xlane.f32.xlu0 %v1054
    %v1056 = vpop.xlane.xlu0 %1055
    %v1057 = vsub.f32 %v1049, %v1053
    %v1058 = vsub.f32 %v1050, %v1056
    %v1059 = vmul.f32 %v1057, 1.442695
    %v1060 = vpow.pop %v1059
    %v1061 = vmul.f32 %v1058, 1.442695
    %v1062 = vpow.pop %v1061
    %v1063 = vsel %vm177, %v1060, 0.0
    %1064 = vadd.xlane.f32.xlu0 %v1063
    %v1065 = vpop.xlane.xlu0 %1064
    %v1066 = vsel %vm177, %v1062, 0.0
    %1067 = vadd.xlane.f32.xlu0 %v1066
    %v1068 = vpop.xlane.xlu0 %1067
    %v1069 = vrcp.pop %v1065
    %v1070 = vrcp.pop %v1068
    %v1071 = vmul.f32 %v1060, %v1069
    %v1072 = vmul.f32 %v1062, %v1070
    %v1073 = vpack.c.bf16 %v1072, %v1071
    %1074 = vrot.lane.b32.xlu0 %v871, 48
    %v1075 = vpop.permute.xlu0 %1074
    %v1078 = vsel %vm177, %v1073, 0
    %1080 = vmatprep.subr.bf16.mxu0 0
    %1081 = vmatpush1.bf16.msra.mxu0 0
    %1082 = vmatprep.subr.bf16.mxu0 0
    %1083 = vmatpush1.bf16.msra.mxu0 0
    %1084 = vmatprep.subr.bf16.mxu0 0
    %1085 = vmatpush1.bf16.msra.mxu0 0
    %1086 = vmatprep.subr.bf16.mxu0 0
    %1087 = vmatpush1.bf16.msra.mxu0 0
    %1088 = vmatprep.subr.bf16.mxu0 0
    %1089 = vmatpush1.bf16.msra.mxu0 0
    %1090 = vmatprep.subr.bf16.mxu0 0
    %1091 = vmatpush1.bf16.msra.mxu0 0
    %1092 = vmatprep.subr.bf16.mxu0 0
    %1093 = vmatpush1.bf16.msra.mxu0 0
    %1094 = vmatprep.subr.bf16.mxu0 0
    %1095 = vmatpush1.bf16.msra.mxu0 %v1075
    %1096 = vmatprep.subr.bf16.mxu0 0
    %1097 = vmatpush2.bf16.msra.mxu0 0
    %1098 = vmatprep.subr.bf16.mxu0 0
    %1099 = vmatpush2.bf16.msra.mxu0 0
    %1100 = vmatprep.subr.bf16.mxu0 0
    %1101 = vmatpush2.bf16.msra.mxu0 0
    %1102 = vmatprep.subr.bf16.mxu0 0
    %1103 = vmatpush2.bf16.msra.mxu0 0
    %1104 = vmatprep.subr.bf16.mxu0 0
    %1105 = vmatpush2.bf16.msra.mxu0 0
    %1106 = vmatprep.subr.bf16.mxu0 0
    %1107 = vmatpush2.bf16.msra.mxu0 0
    %1108 = vmatprep.subr.bf16.mxu0 0
    %1109 = vmatpush2.bf16.msra.mxu0 0
    %1110 = vmatprep.subr.bf16.mxu0 0
    %1111 = vmatpush2.bf16.msra.mxu0 0
    %1112 = vmatprep.mubr.bf16.mxu0 0
    %1113 = vmatmul.mubr.bf16.gmra.mxu0 %v1078
    %v1114 = vpop.f32.mrf.mxu0
    %v1115 = vadd.f32 0.0, %v1114
    %v1116 = vpop.f32.mrf.mxu0
    %v1117 = vpop.f32.mrf.mxu0
    %v1118 = vadd.f32 0.0, %v1117
    %v1119 = vpop.f32.mrf.mxu0
    %1120 = vdwg.mxu0
    %1123 = vrot.lane.b32.xlu0 %v1115, 16
    %v1124 = vpop.permute.xlu0 %1123
    %1125 = vrot.lane.b32.xlu0 %v1118, 16
    %v1126 = vpop.permute.xlu0 %1125
    %v1129 = vsel %vm177, %v990, %v1124
    %v1130 = vsel %vm177, %v993, %v1126
    %v1131 = vpack.c.bf16 %v1130, %v1129
    %s1132 = scalar_lea.vmem %s6, 16
    %v1133 = vld [vmem:[%s1132] sm:$0xf]
    %v1134 = vld [vmem:[%s1132 + $0x4] sm:$0xf]
    %v1135 = vld [vmem:[%s1132 + $0x8] sm:$0xf]
    %v1136 = vld [vmem:[%s1132 + $0xc] sm:$0xf]
    %s1137 = scalar_lea.vmem %s7, 1
    %v1138 = vld [vmem:[%s1137] sm:$0x1]
    %v1140 = vlaneseq
    %v1141 = vshrl.u32 %v1140, 7
    %v1142 = vsub.s32 0, %v1141
    %v1143 = vrot.slane %v1138, %v1142
    %v1149 = vunpack.c.l.b16 %v1133
    %v1150 = vunpack.c.l.b16 %v1134
    %v1151 = vunpack.c.l.b16 %v1135
    %v1152 = vunpack.c.l.b16 %v1136
    %v1153 = vpack.c.b16 %v1150, %v1149
    %v1154 = vpack.c.b16 %v1152, %v1151
    %v1158 = vsel %vm61, %v1131, 0
    %1160 = vmatprep.subr.bf16.mxu0 0
    %1161 = vmatpush1.bf16.msra.mxu0 0
    %1162 = vmatprep.subr.bf16.mxu0 0
    %1163 = vmatpush1.bf16.msra.mxu0 0
    %1164 = vmatprep.subr.bf16.mxu0 0
    %1165 = vmatpush1.bf16.msra.mxu0 0
    %1166 = vmatprep.subr.bf16.mxu0 0
    %1167 = vmatpush1.bf16.msra.mxu0 0
    %1168 = vmatprep.subr.bf16.mxu0 0
    %1169 = vmatpush1.bf16.msra.mxu0 0
    %1170 = vmatprep.subr.bf16.mxu0 0
    %1171 = vmatpush1.bf16.msra.mxu0 0
    %1172 = vmatprep.subr.bf16.mxu0 0
    %1173 = vmatpush1.bf16.msra.mxu0 %v1154
    %1174 = vmatprep.subr.bf16.mxu0 0
    %1175 = vmatpush1.bf16.msra.mxu0 %v1153
    %1176 = vmatprep.subr.bf16.mxu0 0
    %1177 = vmatpush2.bf16.msra.mxu0 0
    %1178 = vmatprep.subr.bf16.mxu0 0
    %1179 = vmatpush2.bf16.msra.mxu0 0
    %1180 = vmatprep.subr.bf16.mxu0 0
    %1181 = vmatpush2.bf16.msra.mxu0 0
    %1182 = vmatprep.subr.bf16.mxu0 0
    %1183 = vmatpush2.bf16.msra.mxu0 0
    %1184 = vmatprep.subr.bf16.mxu0 0
    %1185 = vmatpush2.bf16.msra.mxu0 0
    %1186 = vmatprep.subr.bf16.mxu0 0
    %1187 = vmatpush2.bf16.msra.mxu0 0
    %1188 = vmatprep.subr.bf16.mxu0 0
    %1189 = vmatpush2.bf16.msra.mxu0 0
    %1190 = vmatprep.subr.bf16.mxu0 0
    %1191 = vmatpush2.bf16.msra.mxu0 0
    %1192 = vmatprep.mubr.bf16.mxu0 0
    %1193 = vmatmul.mubr.bf16.gmra.mxu0 %v1158
    %v1194 = vpop.f32.mrf.mxu0
    %v1195 = vadd.f32 %v1143, %v1194
    %v1196 = vpop.f32.mrf.mxu0
    %v1197 = vpop.f32.mrf.mxu0
    %v1198 = vadd.f32 %v1143, %v1197
    %v1199 = vpop.f32.mrf.mxu0
    %1200 = vdwg.mxu0
    %v1201 = vadd.f32 %v1195, %v799
    %v1202 = vadd.f32 %v1198, %v800
    %s1203 = scalar_lea.vmem %s8, 1
    %v1204 = vld [vmem:[%s1203] sm:$0x1]
    %s1205 = scalar_lea.vmem %s9, 1
    %v1206 = vld [vmem:[%s1205] sm:$0x1]
    %v1207 = vsel %vm61, %v1201, 0.0
    %1208 = vadd.xlane.f32.xlu0 %v1207
    %v1209 = vpop.xlane.xlu0 %1208
    %v1210 = vsel %vm61, %v1202, 0.0
    %1211 = vadd.xlane.f32.xlu0 %v1210
    %v1212 = vpop.xlane.xlu0 %1211
    %v1213 = vmul.f32 %v1209, %v68
    %v1214 = vmul.f32 %v1212, %v68
    %v1215 = vsub.f32 %v1201, %v1213
    %v1216 = vsub.f32 %v1202, %v1214
    %v1217 = vmul.f32 %v1215, %v1215
    %v1218 = vmul.f32 %v1216, %v1216
    %v1219 = vsel %vm61, %v1217, 0.0
    %1220 = vadd.xlane.f32.xlu0 %v1219
    %v1221 = vpop.xlane.xlu0 %1220
    %v1222 = vsel %vm61, %v1218, 0.0
    %1223 = vadd.xlane.f32.xlu0 %v1222
    %v1224 = vpop.xlane.xlu0 %1223
    %v1225 = vmul.f32 %v1221, %v68
    %v1226 = vmul.f32 %v1224, %v68
    %v1227 = vadd.f32 %v1225, 1e-12
    %v1228 = vadd.f32 %v1226, 1e-12
    %v1229 = vrsqrt.pop %v1227
    %v1230 = vrsqrt.pop %v1228
    %v1231 = vmul.f32 %v1215, %v1229
    %v1232 = vmul.f32 %v1216, %v1230
    %v1234 = vlaneseq
    %v1235 = vshrl.u32 %v1234, 7
    %v1236 = vsub.s32 0, %v1235
    %v1237 = vrot.slane %v1204, %v1236
    %v1239 = vmul.f32 %v1231, %v1237
    %v1240 = vmul.f32 %v1232, %v1237
    %v1242 = vlaneseq
    %v1243 = vshrl.u32 %v1242, 7
    %v1244 = vsub.s32 0, %v1243
    %v1245 = vrot.slane %v1206, %v1244
    %v1247 = vadd.f32 %v1239, %v1245
    %v1248 = vadd.f32 %v1240, %v1245
    %v1249 = vpack.c.bf16 %v1248, %v1247
    %s1250 = scalar_lea.vmem %s10, 16
    %v1251 = vld [vmem:[%s1250] sm:$0xf]
    %v1252 = vld [vmem:[%s1250 + $0x4] sm:$0xf]
    %v1253 = vld [vmem:[%s1250 + $0x8] sm:$0xf]
    %v1254 = vld [vmem:[%s1250 + $0xc] sm:$0xf]
    %s1255 = scalar_lea.vmem %s11, 1
    %v1256 = vld [vmem:[%s1255] sm:$0x1]
    %v1258 = vlaneseq
    %v1259 = vshrl.u32 %v1258, 7
    %v1260 = vsub.s32 0, %v1259
    %v1261 = vrot.slane %v1256, %v1260
    %v1267 = vunpack.c.l.b16 %v1251
    %v1268 = vunpack.c.l.b16 %v1252
    %v1269 = vunpack.c.l.b16 %v1253
    %v1270 = vunpack.c.l.b16 %v1254
    %v1271 = vpack.c.b16 %v1268, %v1267
    %v1272 = vpack.c.b16 %v1270, %v1269
    %v1276 = vsel %vm61, %v1249, 0
    %1278 = vmatprep.subr.bf16.mxu0 0
    %1279 = vmatpush1.bf16.msra.mxu0 0
    %1280 = vmatprep.subr.bf16.mxu0 0
    %1281 = vmatpush1.bf16.msra.mxu0 0
    %1282 = vmatprep.subr.bf16.mxu0 0
    %1283 = vmatpush1.bf16.msra.mxu0 0
    %1284 = vmatprep.subr.bf16.mxu0 0
    %1285 = vmatpush1.bf16.msra.mxu0 0
    %1286 = vmatprep.subr.bf16.mxu0 0
    %1287 = vmatpush1.bf16.msra.mxu0 0
    %1288 = vmatprep.subr.bf16.mxu0 0
    %1289 = vmatpush1.bf16.msra.mxu0 0
    %1290 = vmatprep.subr.bf16.mxu0 0
    %1291 = vmatpush1.bf16.msra.mxu0 %v1272
    %1292 = vmatprep.subr.bf16.mxu0 0
    %1293 = vmatpush1.bf16.msra.mxu0 %v1271
    %1294 = vmatprep.subr.bf16.mxu0 0
    %1295 = vmatpush2.bf16.msra.mxu0 0
    %1296 = vmatprep.subr.bf16.mxu0 0
    %1297 = vmatpush2.bf16.msra.mxu0 0
    %1298 = vmatprep.subr.bf16.mxu0 0
    %1299 = vmatpush2.bf16.msra.mxu0 0
    %1300 = vmatprep.subr.bf16.mxu0 0
    %1301 = vmatpush2.bf16.msra.mxu0 0
    %1302 = vmatprep.subr.bf16.mxu0 0
    %1303 = vmatpush2.bf16.msra.mxu0 0
    %1304 = vmatprep.subr.bf16.mxu0 0
    %1305 = vmatpush2.bf16.msra.mxu0 0
    %1306 = vmatprep.subr.bf16.mxu0 0
    %1307 = vmatpush2.bf16.msra.mxu0 0
    %1308 = vmatprep.subr.bf16.mxu0 0
    %1309 = vmatpush2.bf16.msra.mxu0 0
    %1310 = vmatprep.mubr.bf16.mxu0 0
    %1311 = vmatmul.mubr.bf16.gmra.mxu0 %v1276
    %v1312 = vpop.f32.mrf.mxu0
    %v1313 = vadd.f32 %v1261, %v1312
    %v1314 = vpop.f32.mrf.mxu0
    %v1315 = vpop.f32.mrf.mxu0
    %v1316 = vadd.f32 %v1261, %v1315
    %v1317 = vpop.f32.mrf.mxu0
    %1318 = vdwg.mxu0
    %v1319 = vmul.f32 %v1313, 0.5
    %v1320 = vmul.f32 %v1316, 0.5
    %v1321 = vmul.f32 %v1313, 0.70710677
    %v1322 = vmul.f32 %v1316, 0.70710677
    %v1323 = vand.u32 2147483647, %v1321
    %v1324 = vand.u32 2147483647, %v1322
    %v1325 = vmul.f32 %v1323, 0.3275911
    %v1326 = vmul.f32 %v1324, 0.3275911
    %v1327 = vadd.f32 %v1325, 1.0
    %v1328 = vadd.f32 %v1326, 1.0
    %v1329 = vrcp.pop %v1327
    %v1330 = vmul.f32 1.0, %v1329
    %v1331 = vrcp.pop %v1328
    %v1332 = vmul.f32 1.0, %v1331
    %v1333 = vmul.f32 %v1330, 1.0614054
    %v1334 = vmul.f32 %v1332, 1.0614054
    %v1335 = vadd.f32 %v1333, -1.4531521
    %v1336 = vadd.f32 %v1334, -1.4531521
    %v1337 = vmul.f32 %v1335, %v1330
    %v1338 = vmul.f32 %v1336, %v1332
    %v1339 = vadd.f32 %v1337, 1.4214138
    %v1340 = vadd.f32 %v1338, 1.4214138
    %v1341 = vmul.f32 %v1339, %v1330
    %v1342 = vmul.f32 %v1340, %v1332
    %v1343 = vadd.f32 %v1341, -0.28449672
    %v1344 = vadd.f32 %v1342, -0.28449672
    %v1345 = vmul.f32 %v1343, %v1330
    %v1346 = vmul.f32 %v1344, %v1332
    %v1347 = vadd.f32 %v1345, 0.2548296
    %v1348 = vadd.f32 %v1346, 0.2548296
    %v1349 = vmul.f32 %v1347, %v1330
    %v1350 = vmul.f32 %v1348, %v1332
    %v1351 = vsub.f32 0.0, %v1323
    %v1352 = vsub.f32 0.0, %v1324
    %v1353 = vmul.f32 %v1351, %v1323
    %v1354 = vmul.f32 %v1352, %v1324
    %v1355 = vmul.f32 %v1353, 1.442695
    %v1356 = vpow.pop %v1355
    %v1357 = vmul.f32 %v1354, 1.442695
    %v1358 = vpow.pop %v1357
    %v1359 = vmul.f32 %v1349, %v1356
    %v1360 = vmul.f32 %v1350, %v1358
    %v1361 = vsub.f32 1.0, %v1359
    %v1362 = vsub.f32 1.0, %v1360
    %vm1363 = vcmp.ge.f32.partialorder %v1321, 0.0
    %vm1364 = vcmp.ge.f32.partialorder %v1322, 0.0
    %v1365 = vsub.f32 0.0, %v1361
    %v1366 = vsub.f32 0.0, %v1362
    %v1367 = vsel %vm1363, %v1361, %v1365
    %v1368 = vsel %vm1364, %v1362, %v1366
    %v1369 = vadd.f32 %v1367, 1.0
    %v1370 = vadd.f32 %v1368, 1.0
    %v1371 = vmul.f32 %v1319, %v1369
    %v1372 = vmul.f32 %v1320, %v1370
    %v1373 = vpack.c.bf16 %v1372, %v1371
    %s1374 = scalar_lea.vmem %s12, 32
    %v1375 = vld [vmem:[%s1374] sm:$0xf]
    %v1376 = vld [vmem:[%s1374 + $0x4] sm:$0xf]
    %v1377 = vld [vmem:[%s1374 + $0x8] sm:$0xf]
    %v1378 = vld [vmem:[%s1374 + $0xc] sm:$0xf]
    %v1379 = vld [vmem:[%s1374 + $0x10] sm:$0xf]
    %v1380 = vld [vmem:[%s1374 + $0x14] sm:$0xf]
    %v1381 = vld [vmem:[%s1374 + $0x18] sm:$0xf]
    %v1382 = vld [vmem:[%s1374 + $0x1c] sm:$0xf]
    %s1383 = scalar_lea.vmem %s13, 1
    %v1384 = vld [vmem:[%s1383] sm:$0x1]
    %v1386 = vlaneseq
    %v1387 = vshrl.u32 %v1386, 7
    %v1388 = vsub.s32 0, %v1387
    %v1389 = vrot.slane %v1384, %v1388
    %v1399 = vunpack.c.l.b16 %v1375
    %v1400 = vunpack.c.l.b16 %v1376
    %v1401 = vunpack.c.l.b16 %v1377
    %v1402 = vunpack.c.l.b16 %v1378
    %v1403 = vunpack.c.l.b16 %v1379
    %v1404 = vunpack.c.l.b16 %v1380
    %v1405 = vunpack.c.l.b16 %v1381
    %v1406 = vunpack.c.l.b16 %v1382
    %v1407 = vpack.c.b16 %v1400, %v1399
    %v1408 = vpack.c.b16 %v1402, %v1401
    %v1409 = vpack.c.b16 %v1404, %v1403
    %v1410 = vpack.c.b16 %v1406, %v1405
    %v1416 = vsel %vm710, %v1373, 0
    %1418 = vmatprep.subr.bf16.mxu0 0
    %1419 = vmatpush1.bf16.msra.mxu0 0
    %1420 = vmatprep.subr.bf16.mxu0 0
    %1421 = vmatpush1.bf16.msra.mxu0 0
    %1422 = vmatprep.subr.bf16.mxu0 0
    %1423 = vmatpush1.bf16.msra.mxu0 0
    %1424 = vmatprep.subr.bf16.mxu0 0
    %1425 = vmatpush1.bf16.msra.mxu0 0
    %1426 = vmatprep.subr.bf16.mxu0 0
    %1427 = vmatpush1.bf16.msra.mxu0 %v1410
    %1428 = vmatprep.subr.bf16.mxu0 0
    %1429 = vmatpush1.bf16.msra.mxu0 %v1409
    %1430 = vmatprep.subr.bf16.mxu0 0
    %1431 = vmatpush1.bf16.msra.mxu0 %v1408
    %1432 = vmatprep.subr.bf16.mxu0 0
    %1433 = vmatpush1.bf16.msra.mxu0 %v1407
    %1434 = vmatprep.subr.bf16.mxu0 0
    %1435 = vmatpush2.bf16.msra.mxu0 0
    %1436 = vmatprep.subr.bf16.mxu0 0
    %1437 = vmatpush2.bf16.msra.mxu0 0
    %1438 = vmatprep.subr.bf16.mxu0 0
    %1439 = vmatpush2.bf16.msra.mxu0 0
    %1440 = vmatprep.subr.bf16.mxu0 0
    %1441 = vmatpush2.bf16.msra.mxu0 0
    %1442 = vmatprep.subr.bf16.mxu0 0
    %1443 = vmatpush2.bf16.msra.mxu0 0
    %1444 = vmatprep.subr.bf16.mxu0 0
    %1445 = vmatpush2.bf16.msra.mxu0 0
    %1446 = vmatprep.subr.bf16.mxu0 0
    %1447 = vmatpush2.bf16.msra.mxu0 0
    %1448 = vmatprep.subr.bf16.mxu0 0
    %1449 = vmatpush2.bf16.msra.mxu0 0
    %1450 = vmatprep.mubr.bf16.mxu0 0
    %1451 = vmatmul.mubr.bf16.gmra.mxu0 %v1416
    %v1452 = vpop.f32.mrf.mxu0
    %v1453 = vadd.f32 %v1389, %v1452
    %v1454 = vpop.f32.mrf.mxu0
    %v1455 = vpop.f32.mrf.mxu0
    %v1456 = vadd.f32 %v1389, %v1455
    %v1457 = vpop.f32.mrf.mxu0
    %1458 = vdwg.mxu0
    %v1459 = vadd.f32 %v1453, %v1247
    %v1460 = vadd.f32 %v1456, %v1248
    %s1461 = scalar_lea.vmem %s14, 1
    %v1462 = vld [vmem:[%s1461] sm:$0x1]
    %s1463 = scalar_lea.vmem %s15, 1
    %v1464 = vld [vmem:[%s1463] sm:$0x1]
    %v1465 = vsel %vm61, %v1459, 0.0
    %1466 = vadd.xlane.f32.xlu0 %v1465
    %v1467 = vpop.xlane.xlu0 %1466
    %v1468 = vsel %vm61, %v1460, 0.0
    %1469 = vadd.xlane.f32.xlu0 %v1468
    %v1470 = vpop.xlane.xlu0 %1469
    %v1471 = vmul.f32 %v1467, %v68
    %v1472 = vmul.f32 %v1470, %v68
    %v1473 = vsub.f32 %v1459, %v1471
    %v1474 = vsub.f32 %v1460, %v1472
    %v1475 = vmul.f32 %v1473, %v1473
    %v1476 = vmul.f32 %v1474, %v1474
    %v1477 = vsel %vm61, %v1475, 0.0
    %1478 = vadd.xlane.f32.xlu0 %v1477
    %v1479 = vpop.xlane.xlu0 %1478
    %v1480 = vsel %vm61, %v1476, 0.0
    %1481 = vadd.xlane.f32.xlu0 %v1480
    %v1482 = vpop.xlane.xlu0 %1481
    %v1483 = vmul.f32 %v1479, %v68
    %v1484 = vmul.f32 %v1482, %v68
    %v1485 = vadd.f32 %v1483, 1e-12
    %v1486 = vadd.f32 %v1484, 1e-12
    %v1487 = vrsqrt.pop %v1485
    %v1488 = vrsqrt.pop %v1486
    %v1489 = vmul.f32 %v1473, %v1487
    %v1490 = vmul.f32 %v1474, %v1488
    %v1492 = vlaneseq
    %v1493 = vshrl.u32 %v1492, 7
    %v1494 = vsub.s32 0, %v1493
    %v1495 = vrot.slane %v1462, %v1494
    %v1497 = vmul.f32 %v1489, %v1495
    %v1498 = vmul.f32 %v1490, %v1495
    %v1500 = vlaneseq
    %v1501 = vshrl.u32 %v1500, 7
    %v1502 = vsub.s32 0, %v1501
    %v1503 = vrot.slane %v1464, %v1502
    %v1505 = vadd.f32 %v1497, %v1503
    %v1506 = vadd.f32 %v1498, %v1503
    %1507 = vst.msk [vmem:[#allocation2] sm:$0xff] %vm61, %v1505
    %1508 = vst.msk [vmem:[#allocation2 + $0x8] sm:$0xff] %vm61, %v1506
    // Predicated region
    $region66: #{bert_forward.1} parent=1 // pred_check
      _
    $region67: #{bert_forward.1} parent=1 // pred_check_branch
      %1510 = sbr.rel (0) target = $region69
    $region68: #{bert_forward.1} parent=1 // pred_region
      %s1512 = ssub.s32 256, 256
      %1513 = vsyncadd [#allocation3], %s1512
      %s1514 = sshll.u32 [#allocation2], 4
      %s1515 = int_to_ptr.vmem [resolvable:$true] %s1514
      %1520 = dma.vmem_to_hbm [thread:$0]  %s1515, 256, %s16, [#allocation3], 128, 128, 8
    $region69: #{bert_forward.1} parent=1 // pred_fallthru
      _
    // Predicated region
    $region70: #{bert_forward.1} parent=1 // pred_check
      _
    $region71: #{bert_forward.1} parent=1 // pred_check_branch
      %1522 = sbr.rel (0) target = $region73
    $region72: #{bert_forward.1} parent=1 // pred_region
      %1523 = dma.done [#allocation3], 256
    $region73: #{bert_forward.1} parent=1 // pred_fallthru
      _
    %1524 = vsyncpa [#allocation3], 1

</llo_original>
